<compile_context>
chip_gen: v7x
topology: tpu7x:2x2x1
jax: 0.10.0
libtpu: 0.0.40
codegen_flags: <defaults>
</compile_context>

<pallas_src>
import math

import jax
import jax.numpy as jnp
from jax.experimental import pallas as pl
from jax.experimental.pallas import tpu as pltpu


def _round_up(v, m):
    return (v + m - 1) // m * m


def _mxu(a, b):
    """MXU matmul: bf16 operands, f32 accumulate (weights already bf16)."""
    return jnp.dot(a.astype(jnp.bfloat16), b.astype(jnp.bfloat16),
                   preferred_element_type=jnp.float32)


def _sigmoid(t):
    return 1.0 / (1.0 + jnp.exp(-t))


# ----------------------------------------------------------------------------
# Parameter initialization (deterministic, nn.Linear-style uniform bounds)
# ----------------------------------------------------------------------------
def init_params(key, H, C, Dt, ehr_feat=76, vocab=50):
    def lin(k, din, dout):
        k1, k2 = jax.random.split(k)
        bound = 1.0 / math.sqrt(din)
        w = jax.random.uniform(k1, (din, dout), jnp.float32, -bound, bound)
        b = jax.random.uniform(k2, (1, dout), jnp.float32, -bound, bound)
        return w, b

    ks = jax.random.split(key, 16)
    p = {}
    # stand-in encoder params (EHRTransformer / NoteModel internals unspecified)
    p["ehr_sh"] = lin(ks[0], ehr_feat, H)
    p["ehr_di"] = lin(ks[1], ehr_feat, H)
    p["ehr_cls"] = lin(ks[2], H, C)
    p["emb_sh"] = jax.random.normal(ks[3], (vocab, Dt), jnp.float32) * 0.02
    p["emb_sp"] = jax.random.normal(ks[4], (vocab, Dt), jnp.float32) * 0.02
    # DrFuse fusion params
    p["ns_fc"] = lin(ks[5], Dt, H)
    p["nd_fc"] = lin(ks[6], Dt, H)
    p["note_lin"] = lin(ks[7], H, C)
    p["sp1"] = lin(ks[8], H, 2 * H)
    p["sp2"] = lin(ks[9], 2 * H, H)
    p["sp3"] = lin(ks[10], H, H)
    p["fuse"] = lin(ks[11], H, C)
    p["attn"] = lin(ks[12], H, (2 + C) * H)
    p["final"] = lin(ks[13], H, C)
    return p


# ----------------------------------------------------------------------------
# Forward wrapper: XLA glue (mask norm + embedding gather + operand packing)
# plus ONE pallas_call that runs the whole fused forward.
# ----------------------------------------------------------------------------
@jax.jit
def drfuse_forward(params, x, token, note_mask, seq_lengths, pairs):
    f32, bf16 = jnp.float32, jnp.bfloat16
    B, T, F_EHR = x.shape
    L = token.shape[1]
    H = params["sp3"][0].shape[0]
    C = params["fuse"][0].shape[1]
    Dt = params["ns_fc"][0].shape[0]
    CH = C * H
    KQVH = (2 + C) * H + 3 * C            # merged [k|q|v|heads] output width

    # ---- batch padding: every row-stacked slab / slice is sublane aligned ----
    Bp = _round_up(B, 8)
    padr = Bp - B

    # TODO(synk): EHRTransformer / NoteModel internals are not specified in the
    # reference module; stand-ins = masked-mean pooling + linear projections.
    # Only the embedding gather (and GRL, identity in forward) stays in XLA.
    tmask = (jnp.arange(T)[None, :] < seq_lengths[:, None]).astype(f32)
    tmask_w = (tmask / jnp.maximum(tmask.sum(1, keepdims=True), 1.0))[:, :, None]
    nmask = note_mask.astype(f32)
    nmask_w = (nmask / jnp.maximum(nmask.sum(1, keepdims=True), 1.0))[:, :, None]
    emb_sh = jnp.take(params["emb_sh"], token, axis=0)
    emb_sp = jnp.take(params["emb_sp"], token, axis=0)
    emb_stack = jnp.stack([emb_sh, emb_sp], axis=0).astype(bf16)   # [2,B,L,Dt]

    def padb(a, axis):
        if padr == 0:
            return a
        cfg = [(0, 0)] * a.ndim
        cfg[axis] = (0, padr)
        return jnp.pad(a, cfg)

    x_p = padb(x.astype(bf16), 0)                 # bulky activations go as bf16
    tmask_p = padb(tmask_w, 0)
    emb_p = padb(emb_stack, 1)
    nmask_p = padb(nmask_w, 0)
    pairs_p = padb(pairs.reshape(B, 1).astype(f32), 0)

    # ------------------------- weight / bias packing -------------------------
    w_esh, b_esh = params["ehr_sh"]
    w_edi, b_edi = params["ehr_di"]
    w_ecls, b_ecls = params["ehr_cls"]
    w_nsfc, b_nsfc = params["ns_fc"]
    w_ndfc, b_ndfc = params["nd_fc"]
    w_nlin, b_nlin = params["note_lin"]
    w_sp1, b_sp1 = params["sp1"]
    w_sp2, b_sp2 = params["sp2"]
    w_sp3, b_sp3 = params["sp3"]
    w_fuse, b_fuse = params["fuse"]
    w_attn, b_attn = params["attn"]
    w_final, b_final = params["final"]

    # attn_proj chunks as (q, v, k_0..k_{C-1}); reorder to (k..., q, v)
    w_q, b_q = w_attn[:, 0:H], b_attn[:, 0:H]
    w_v, b_v = w_attn[:, H:2 * H], b_attn[:, H:2 * H]
    w_k, b_k = w_attn[:, 2 * H:], b_attn[:, 2 * H:]

    # slab 1: K=76 (both EHR projections share pooled_ehr)
    w_ehr = jnp.concatenate([w_esh, w_edi], axis=1).astype(bf16)         # [76,2H]
    # slab 2: K=Dt (note shared/distinct fc on row-stacked note features)
    w_note = jnp.concatenate([w_nsfc, w_ndfc], axis=1).astype(bf16)      # [Dt,2H]
    # slab 3: K=H -> [k|q|v|heads] (k first, 128-lane aligned) + sp1 + sp3
    w_heads = jnp.concatenate([w_ecls, w_fuse, w_nlin], axis=1)          # [H,3C]
    w_kqvh = jnp.concatenate([w_k, w_q, w_v, w_heads], axis=1)           # [H,KQVH]
    w_hslab = jnp.concatenate([w_kqvh, w_sp1, w_sp3], axis=1).astype(bf16)
    # slab 4: K=2H
    w_sp2b = w_sp2.astype(bf16)                                          # [2H,H]
    # slab 5: one f32 bias / row-vector row
    wf_row = w_final.T.reshape(1, CH)                 # class-major W_final rows
    bias_slab = jnp.concatenate(
        [jnp.concatenate([b_esh, b_edi], axis=1),
         jnp.concatenate([b_nsfc, b_ndfc], axis=1),
         jnp.concatenate([b_k, b_q, b_v, b_ecls, b_fuse, b_nlin], axis=1),
         b_sp1, b_sp2, b_sp3, b_final, wf_row], axis=1)

    # static lane offsets inside the slabs (shared by wrapper + kernel closure)
    OB_EHR = 0
    OB_NOTE = OB_EHR + 2 * H
    OB_KQVH = OB_NOTE + 2 * H
    OB_SP1 = OB_KQVH + KQVH
    OB_SP2 = OB_SP1 + 2 * H
    OB_SP3 = OB_SP2 + H
    OB_FIN = OB_SP3 + H
    OB_WF = OB_FIN + C
    NB = OB_WF + CH

    OW_KQVH = 0
    OW_SP1 = KQVH
    OW_SP3 = KQVH + 2 * H
    WH = KQVH + 3 * H

    # lane-dense output slab layout
    O_FF = 4 * H
    O_SM = O_FF + CH
    TOTAL = _round_up(O_SM + 7 * C, 128)

    # batch tiling (grid of 1 for the toy shapes; parallel across TCs otherwise)
    TB = 64 if Bp % 64 == 0 else 8
    nb = Bp // TB
    # TODO(synk): for very large L*Dt on v7x (64 MiB VMEM), also tile L and
    # stream the note embeddings instead of holding a full [2,TB,L,Dt] block.

    # ------------------------------- kernel ---------------------------------
    def kernel(x_ref, tmask_ref, emb_ref, nmask_ref, pairs_ref,
               wehr_ref, wnote_ref, whs_ref, wsp2_ref, bias_ref, out_ref):
        bias = bias_ref                                   # [1, NB] f32
        pairs_v = pairs_ref[...]                          # [TB, 1]

        # ---- EHR encoder stand-in: masked-mean pool + merged projection ----
        pooled_ehr = jnp.sum(x_ref[...].astype(f32) * tmask_ref[...], axis=1)
        ehr_proj = _mxu(pooled_ehr, wehr_ref[...]) + bias[:, OB_EHR:OB_EHR + 2 * H]
        feat_ehr_shared_raw = ehr_proj[:, 0:H]
        feat_ehr_distinct = ehr_proj[:, H:2 * H]

        # ---- Note encoder stand-in: pool both tables, one stacked matmul ----
        nmask_v = nmask_ref[...]
        note_sh = jnp.sum(emb_ref[0].astype(f32) * nmask_v, axis=1)      # [TB,Dt]
        note_sp = jnp.sum(emb_ref[1].astype(f32) * nmask_v, axis=1)
        note_stack = jnp.concatenate([note_sh, note_sp], axis=0)         # [2TB,Dt]
        note_proj = _mxu(note_stack, wnote_ref[...]) + bias[:, OB_NOTE:OB_NOTE + 2 * H]
        feat_note_shared_raw = note_proj[0:TB, 0:H]
        feat_note_distinct = note_proj[TB:2 * TB, H:2 * H]

        # ---- shared_project MLP on row-stacked (ehr, note) shared features ----
        sp_in = jnp.concatenate([feat_ehr_shared_raw, feat_note_shared_raw], axis=0)
        hmid = jnp.maximum(_mxu(sp_in, whs_ref[:, OW_SP1:OW_SP1 + 2 * H])
                           + bias[:, OB_SP1:OB_SP1 + 2 * H], 0.0)
        hmid = jnp.maximum(_mxu(hmid, wsp2_ref[...])
                           + bias[:, OB_SP2:OB_SP2 + H], 0.0)
        sp_out = _mxu(hmid, whs_ref[:, OW_SP3:OW_SP3 + H]) + bias[:, OB_SP3:OB_SP3 + H]
        h1 = sp_out[0:TB]
        h2 = sp_out[TB:2 * TB]

        # logsumexp([h1+h2, h1+h2, h1, h2]) - logsumexp([0, 0, h1, h2])
        s12 = h1 + h2
        m1 = jnp.maximum(jnp.maximum(s12, h1), h2)
        lse1 = jnp.log(2.0 * jnp.exp(s12 - m1) + jnp.exp(h1 - m1) + jnp.exp(h2 - m1)) + m1
        m2 = jnp.maximum(jnp.maximum(jnp.zeros_like(h1), h1), h2)
        lse2 = jnp.log(2.0 * jnp.exp(-m2) + jnp.exp(h1 - m2) + jnp.exp(h2 - m2)) + m2
        feat_avg = pairs_v * (lse1 - lse2) + (1.0 - pairs_v) * h1

        # ---- ONE merged [k|q|v|heads] matmul on the row-stacked slots ----
        slots = jnp.concatenate(
            [feat_ehr_distinct, feat_avg, feat_note_distinct], axis=0)   # [3TB,H]
        kqvh = _mxu(slots, whs_ref[:, OW_KQVH:OW_KQVH + KQVH]) \
            + bias[:, OB_KQVH:OB_KQVH + KQVH]                            # [3TB,KQVH]
        k_all = kqvh[:, 0:CH]
        q_all = kqvh[:, CH:CH + H]
        v_all = kqvh[:, CH + H:CH + 2 * H]
        heads = kqvh[:, CH + 2 * H:CH + 2 * H + 3 * C]

        pred_ehr = _sigmoid(heads[0:TB, 0:C])
        pred_shared = _sigmoid(heads[TB:2 * TB, C:2 * C])
        pred_note = _sigmoid(heads[2 * TB:3 * TB, 2 * C:3 * C])

        q_e, q_s, q_n = q_all[0:TB], q_all[TB:2 * TB], q_all[2 * TB:3 * TB]
        q_mean = pairs_v * ((q_e + q_s + q_n) * (1.0 / 3.0)) \
            + (1.0 - pairs_v) * ((q_e + q_s) * 0.5)

        # per-class segment-sum matrix built from iota (kept f32 -> exact reduce)
        rr = jax.lax.broadcasted_iota(jnp.int32, (CH, C), 0)
        cc = jax.lax.broadcasted_iota(jnp.int32, (CH, C), 1) * H
        s_sum = ((rr >= cc) & (rr < cc + H)).astype(f32)                 # [CH,C]

        # attention logits: lane-tile q (VPU/XLU), per-class reduction on MXU (f32)
        q_tile = jnp.concatenate([q_mean] * C, axis=1)                   # [TB,CH]
        q3 = jnp.concatenate([q_tile] * 3, axis=0)                       # [3TB,CH]
        logits = jnp.dot(k_all * q3, s_sum,
                         preferred_element_type=f32) * (1.0 / math.sqrt(float(H)))

        l_e, l_s = logits[0:TB], logits[TB:2 * TB]
        l_n = jnp.where(pairs_v > 0.5, logits[2 * TB:3 * TB], jnp.float32(-1e30))

        m = jnp.maximum(jnp.maximum(l_e, l_s), l_n)
        e_e = jnp.exp(l_e - m)
        e_s = jnp.exp(l_s - m)
        e_n = jnp.exp(l_n - m)
        denom = e_e + e_s + e_n
        w_e = e_e / denom            # exact divide: attn weights sum to 1
        w_s = e_s / denom
        w_n = e_n / denom                                                # [TB,C]

        # feat_final[b,c,:] = w_e[b,c]*v_e[b] + w_s[b,c]*v_s[b] + w_n[b,c]*v_n[b]
        v_e, v_s, v_n = v_all[0:TB], v_all[TB:2 * TB], v_all[2 * TB:3 * TB]
        ff_parts = []
        for c in range(C):           # static unroll; broadcast-mul on VPU, no MXU
            ff_parts.append(w_e[:, c:c + 1] * v_e
                            + w_s[:, c:c + 1] * v_s
                            + w_n[:, c:c + 1] * v_n)
        ff_flat = jnp.concatenate(ff_parts, axis=1)                      # [TB,CH]

        # diagonal of final_pred_fc via f32 per-class segment-sum on the MXU
        wf = bias[:, OB_WF:OB_WF + CH]                                   # [1,CH]
        pred_final = _sigmoid(
            jnp.dot(ff_flat * wf, s_sum, preferred_element_type=f32)
            + bias[:, OB_FIN:OB_FIN + C])

        # ---- assemble the whole result in-register, single unmasked store ----
        pieces = [h1, h2, feat_ehr_distinct, feat_note_distinct, ff_flat,
                  pred_final, pred_shared, pred_ehr, pred_note, w_e, w_s, w_n]
        padw = TOTAL - (O_SM + 7 * C)
        if padw > 0:
            pieces.append(jnp.zeros((TB, padw), f32))
        out_ref[...] = jnp.concatenate(pieces, axis=1)

    # ------------------------------ pallas_call ------------------------------
    in_specs = [
        pl.BlockSpec((TB, T, F_EHR), lambda i: (i, 0, 0)),
        pl.BlockSpec((TB, T, 1), lambda i: (i, 0, 0)),
        pl.BlockSpec((2, TB, L, Dt), lambda i: (0, i, 0, 0)),
        pl.BlockSpec((TB, L, 1), lambda i: (i, 0, 0)),
        pl.BlockSpec((TB, 1), lambda i: (i, 0)),
        pl.BlockSpec((F_EHR, 2 * H), lambda i: (0, 0)),     # weights: constant
        pl.BlockSpec((Dt, 2 * H), lambda i: (0, 0)),        # index_map -> stay
        pl.BlockSpec((H, WH), lambda i: (0, 0)),            # VMEM resident
        pl.BlockSpec((2 * H, H), lambda i: (0, 0)),
        pl.BlockSpec((1, NB), lambda i: (0, 0)),
    ]
    slab = pl.pallas_call(
        kernel,
        out_shape=jax.ShapeDtypeStruct((Bp, TOTAL), f32),
        grid=(nb,),
        in_specs=in_specs,
        out_specs=pl.BlockSpec((TB, TOTAL), lambda i: (i, 0)),
        compiler_params=pltpu.CompilerParams(
            dimension_semantics=("parallel",)),
    )(x_p, tmask_p, emb_p, nmask_p, pairs_p,
      w_ehr, w_note, w_hslab, w_sp2b, bias_slab)

    # --------------------------- unpack the slab ----------------------------
    slab = slab[:B]
    h1 = slab[:, 0:H]
    h2 = slab[:, H:2 * H]
    feat_ehr_distinct = slab[:, 2 * H:3 * H]
    feat_note_distinct = slab[:, 3 * H:4 * H]
    feat_final = slab[:, O_FF:O_FF + CH].reshape(B, C, H)
    pred_final = slab[:, O_SM + 0 * C:O_SM + 1 * C]
    pred_shared = slab[:, O_SM + 1 * C:O_SM + 2 * C]
    pred_ehr = slab[:, O_SM + 2 * C:O_SM + 3 * C]
    pred_note = slab[:, O_SM + 3 * C:O_SM + 4 * C]
    w_e = slab[:, O_SM + 4 * C:O_SM + 5 * C]
    w_s = slab[:, O_SM + 5 * C:O_SM + 6 * C]
    w_n = slab[:, O_SM + 6 * C:O_SM + 7 * C]
    attn_weights = jnp.stack([w_e, w_s, w_n], axis=-1)                   # [B,C,3]

    return {
        "feat_ehr_shared": h1,
        "feat_note_shared": h2,
        "feat_ehr_distinct": feat_ehr_distinct,
        "feat_note_distinct": feat_note_distinct,
        "feat_final": feat_final,
        "pred_final": pred_final,
        "pred_shared": pred_shared,
        "pred_ehr": pred_ehr,
        "pred_note": pred_note,
        "attn_weights": attn_weights,
    }


# ----------------------------------------------------------------------------
if __name__ == "__main__":
    B, T, F_EHR = 2, 8, 76          # EHR input: [B, T, 76] (76 fixed by module)
    L, VOCAB = 6, 50                # note tokens
    H, C, DT = 32, 4, 48            # hidden_size, num_classes, args.d_txt

    key = jax.random.PRNGKey(0)
    kx, kt, _ = jax.random.split(key, 3)

    x = jax.random.normal(kx, (B, T, F_EHR), jnp.float32)
    seq_lengths = jnp.array([T, 5], dtype=jnp.int32)
    token = jax.random.randint(kt, (B, L), 0, VOCAB, dtype=jnp.int32)
    note_lens = jnp.array([L, 4], dtype=jnp.int32)
    note_mask = (jnp.arange(L)[None, :] < note_lens[:, None]).astype(jnp.float32)
    pairs = jnp.array([1.0, 0.0], dtype=jnp.float32)   # exercise both branches
    # grl_lambda only affects the gradient-reversal layer (identity in forward).

    params = init_params(jax.random.PRNGKey(1), H, C, DT, ehr_feat=F_EHR, vocab=VOCAB)

    outputs = drfuse_forward(params, x, token, note_mask, seq_lengths, pairs)
    jax.block_until_ready(outputs["pred_final"])

    assert outputs["feat_ehr_shared"].shape == (B, H)
    assert outputs["feat_note_shared"].shape == (B, H)
    assert outputs["feat_ehr_distinct"].shape == (B, H)
    assert outputs["feat_note_distinct"].shape == (B, H)
    assert outputs["feat_final"].shape == (B, C, H)
    assert outputs["pred_final"].shape == (B, C)
    assert outputs["pred_shared"].shape == (B, C)
    assert outputs["pred_ehr"].shape == (B, C)
    assert outputs["pred_note"].shape == (B, C)
    assert outputs["attn_weights"].shape == (B, C, 3)
    assert bool(jnp.all(jnp.isfinite(outputs["pred_final"])))
    assert bool(jnp.all(jnp.abs(outputs["attn_weights"].sum(-1) - 1.0) < 1e-4))
    print("KERNEL_OK")
</pallas_src>

<mosaic_0001>
module attributes {stable_mosaic.version = 11 : i64} {
  func.func @kernel(%arg0: i32, %arg1: memref<8x8x76xbf16, #tpu.memory_space<vmem>>, %arg2: memref<8x8x1xf32, #tpu.memory_space<vmem>>, %arg3: memref<2x8x6x48xbf16, #tpu.memory_space<vmem>>, %arg4: memref<8x6x1xf32, #tpu.memory_space<vmem>>, %arg5: memref<8x1xf32, #tpu.memory_space<vmem>>, %arg6: memref<76x64xbf16, #tpu.memory_space<vmem>>, %arg7: memref<48x64xbf16, #tpu.memory_space<vmem>>, %arg8: memref<32x300xbf16, #tpu.memory_space<vmem>>, %arg9: memref<64x32xbf16, #tpu.memory_space<vmem>>, %arg10: memref<1x592xf32, #tpu.memory_space<vmem>>, %arg11: memref<8x384xf32, #tpu.memory_space<vmem>>) attributes {dimension_semantics = [#tpu.dimension_semantics<parallel>], iteration_bounds = array<i64: 1>, scalar_prefetch = 0 : i64, scratch_operands = 0 : i64, tpu.core_type = #tpu.core_type<tc>, window_params = [{transform_indices = @transform_0, window_bounds = array<i64: 8, 8, 76>}, {transform_indices = @transform_1, window_bounds = array<i64: 8, 8, 1>}, {transform_indices = @transform_2, window_bounds = array<i64: 2, 8, 6, 48>}, {transform_indices = @transform_3, window_bounds = array<i64: 8, 6, 1>}, {transform_indices = @transform_4, window_bounds = array<i64: 8, 1>}, {pipeline_mode = #tpu.pipeline_mode<synchronous>, transform_indices = @transform_5, window_bounds = array<i64: 76, 64>}, {pipeline_mode = #tpu.pipeline_mode<synchronous>, transform_indices = @transform_6, window_bounds = array<i64: 48, 64>}, {pipeline_mode = #tpu.pipeline_mode<synchronous>, transform_indices = @transform_7, window_bounds = array<i64: 32, 300>}, {pipeline_mode = #tpu.pipeline_mode<synchronous>, transform_indices = @transform_8, window_bounds = array<i64: 64, 32>}, {pipeline_mode = #tpu.pipeline_mode<synchronous>, transform_indices = @transform_9, window_bounds = array<i64: 1, 592>}, {transform_indices = @transform_10, window_bounds = array<i64: 8, 384>}]} {
    %c0 = arith.constant 0 : index
    %c0_0 = arith.constant 0 : index
    %0 = vector.load %arg5[%c0, %c0_0] : memref<8x1xf32, #tpu.memory_space<vmem>>, vector<8x1xf32>
    %c0_1 = arith.constant 0 : index
    %c0_2 = arith.constant 0 : index
    %c0_3 = arith.constant 0 : index
    %1 = vector.load %arg1[%c0_1, %c0_2, %c0_3] : memref<8x8x76xbf16, #tpu.memory_space<vmem>>, vector<8x8x76xbf16>
    %2 = arith.extf %1 : vector<8x8x76xbf16> to vector<8x8x76xf32>
    %c0_4 = arith.constant 0 : index
    %c0_5 = arith.constant 0 : index
    %c0_6 = arith.constant 0 : index
    %3 = vector.load %arg2[%c0_4, %c0_5, %c0_6] : memref<8x8x1xf32, #tpu.memory_space<vmem>>, vector<8x8x1xf32>
    %4 = vector.broadcast %3 : vector<8x8x1xf32> to vector<8x8x76xf32>
    %5 = arith.mulf %2, %4 : vector<8x8x76xf32>
    %cst = arith.constant dense<0.000000e+00> : vector<8x76xf32>
    %6 = vector.multi_reduction <add>, %5, %cst [1] : vector<8x8x76xf32> to vector<8x76xf32>
    %c0_7 = arith.constant 0 : index
    %c0_8 = arith.constant 0 : index
    %7 = vector.load %arg6[%c0_7, %c0_8] : memref<76x64xbf16, #tpu.memory_space<vmem>>, vector<76x64xbf16>
    %8 = arith.truncf %6 : vector<8x76xf32> to vector<8x76xbf16>
    %cst_9 = arith.constant dense<0.000000e+00> : vector<8x64xf32>
    %9 = tpu.matmul %8, %7, %cst_9 {dimension_numbers = #tpu.dot_dimension_numbers<[1], [0], [0], [1], [0, 0, 1, 1], [], []>} : vector<8x76xbf16>, vector<76x64xbf16>, vector<8x64xf32> -> vector<8x64xf32>
    %c0_10 = arith.constant 0 : index
    %c0_11 = arith.constant 0 : index
    %10 = vector.load %arg10[%c0_10, %c0_11] : memref<1x592xf32, #tpu.memory_space<vmem>>, vector<1x64xf32>
    %11 = vector.broadcast %10 : vector<1x64xf32> to vector<8x64xf32>
    %12 = arith.addf %9, %11 : vector<8x64xf32>
    %13 = vector.extract_strided_slice %12 {offsets = [0, 0], sizes = [8, 32], strides = [1, 1]} : vector<8x64xf32> to vector<8x32xf32>
    %14 = vector.extract_strided_slice %12 {offsets = [0, 32], sizes = [8, 32], strides = [1, 1]} : vector<8x64xf32> to vector<8x32xf32>
    %c0_12 = arith.constant 0 : index
    %c0_13 = arith.constant 0 : index
    %c0_14 = arith.constant 0 : index
    %15 = vector.load %arg4[%c0_12, %c0_13, %c0_14] : memref<8x6x1xf32, #tpu.memory_space<vmem>>, vector<8x6x1xf32>
    %c0_15 = arith.constant 0 : index
    %c0_16 = arith.constant 0 : index
    %c0_17 = arith.constant 0 : index
    %c0_18 = arith.constant 0 : index
    %16 = vector.load %arg3[%c0_15, %c0_16, %c0_17, %c0_18] : memref<2x8x6x48xbf16, #tpu.memory_space<vmem>>, vector<1x8x6x48xbf16>
    %17 = vector.shape_cast %16 : vector<1x8x6x48xbf16> to vector<8x6x48xbf16>
    %18 = arith.extf %17 : vector<8x6x48xbf16> to vector<8x6x48xf32>
    %19 = vector.broadcast %15 : vector<8x6x1xf32> to vector<8x6x48xf32>
    %20 = arith.mulf %18, %19 : vector<8x6x48xf32>
    %cst_19 = arith.constant dense<0.000000e+00> : vector<8x48xf32>
    %21 = vector.multi_reduction <add>, %20, %cst_19 [1] : vector<8x6x48xf32> to vector<8x48xf32>
    %c1 = arith.constant 1 : index
    %c0_20 = arith.constant 0 : index
    %c0_21 = arith.constant 0 : index
    %c0_22 = arith.constant 0 : index
    %22 = vector.load %arg3[%c1, %c0_20, %c0_21, %c0_22] : memref<2x8x6x48xbf16, #tpu.memory_space<vmem>>, vector<1x8x6x48xbf16>
    %23 = vector.shape_cast %22 : vector<1x8x6x48xbf16> to vector<8x6x48xbf16>
    %24 = arith.extf %23 : vector<8x6x48xbf16> to vector<8x6x48xf32>
    %25 = vector.broadcast %15 : vector<8x6x1xf32> to vector<8x6x48xf32>
    %26 = arith.mulf %24, %25 : vector<8x6x48xf32>
    %cst_23 = arith.constant dense<0.000000e+00> : vector<8x48xf32>
    %27 = vector.multi_reduction <add>, %26, %cst_23 [1] : vector<8x6x48xf32> to vector<8x48xf32>
    %28 = tpu.concatenate %21, %27 in 0 : vector<8x48xf32>, vector<8x48xf32> -> vector<16x48xf32>
    %c0_24 = arith.constant 0 : index
    %c0_25 = arith.constant 0 : index
    %29 = vector.load %arg7[%c0_24, %c0_25] : memref<48x64xbf16, #tpu.memory_space<vmem>>, vector<48x64xbf16>
    %30 = arith.truncf %28 : vector<16x48xf32> to vector<16x48xbf16>
    %cst_26 = arith.constant dense<0.000000e+00> : vector<16x64xf32>
    %31 = tpu.matmul %30, %29, %cst_26 {dimension_numbers = #tpu.dot_dimension_numbers<[1], [0], [0], [1], [0, 0, 1, 1], [], []>} : vector<16x48xbf16>, vector<48x64xbf16>, vector<16x64xf32> -> vector<16x64xf32>
    %c0_27 = arith.constant 0 : index
    %c64 = arith.constant 64 : index
    %32 = vector.load %arg10[%c0_27, %c64] : memref<1x592xf32, #tpu.memory_space<vmem>>, vector<1x64xf32>
    %33 = vector.broadcast %32 : vector<1x64xf32> to vector<16x64xf32>
    %34 = arith.addf %31, %33 : vector<16x64xf32>
    %35 = vector.extract_strided_slice %34 {offsets = [0, 0], sizes = [8, 32], strides = [1, 1]} : vector<16x64xf32> to vector<8x32xf32>
    %36 = vector.extract_strided_slice %34 {offsets = [8, 32], sizes = [8, 32], strides = [1, 1]} : vector<16x64xf32> to vector<8x32xf32>
    %37 = tpu.concatenate %13, %35 in 0 : vector<8x32xf32>, vector<8x32xf32> -> vector<16x32xf32>
    %c0_28 = arith.constant 0 : index
    %c204 = arith.constant 204 : index
    %38 = vector.load %arg8[%c0_28, %c204] : memref<32x300xbf16, #tpu.memory_space<vmem>>, vector<32x64xbf16>
    %39 = arith.truncf %37 : vector<16x32xf32> to vector<16x32xbf16>
    %cst_29 = arith.constant dense<0.000000e+00> : vector<16x64xf32>
    %40 = tpu.matmul %39, %38, %cst_29 {dimension_numbers = #tpu.dot_dimension_numbers<[1], [0], [0], [1], [0, 0, 1, 1], [], []>} : vector<16x32xbf16>, vector<32x64xbf16>, vector<16x64xf32> -> vector<16x64xf32>
    %c0_30 = arith.constant 0 : index
    %c332 = arith.constant 332 : index
    %41 = vector.load %arg10[%c0_30, %c332] : memref<1x592xf32, #tpu.memory_space<vmem>>, vector<1x64xf32>
    %42 = vector.broadcast %41 : vector<1x64xf32> to vector<16x64xf32>
    %43 = arith.addf %40, %42 : vector<16x64xf32>
    %cst_31 = arith.constant 0.000000e+00 : f32
    %44 = vector.broadcast %cst_31 : f32 to vector<16x64xf32>
    %45 = arith.maximumf %43, %44 : vector<16x64xf32>
    %c0_32 = arith.constant 0 : index
    %c0_33 = arith.constant 0 : index
    %46 = vector.load %arg9[%c0_32, %c0_33] : memref<64x32xbf16, #tpu.memory_space<vmem>>, vector<64x32xbf16>
    %47 = arith.truncf %45 : vector<16x64xf32> to vector<16x64xbf16>
    %cst_34 = arith.constant dense<0.000000e+00> : vector<16x32xf32>
    %48 = tpu.matmul %47, %46, %cst_34 {dimension_numbers = #tpu.dot_dimension_numbers<[1], [0], [0], [1], [0, 0, 1, 1], [], []>} : vector<16x64xbf16>, vector<64x32xbf16>, vector<16x32xf32> -> vector<16x32xf32>
    %c0_35 = arith.constant 0 : index
    %c396 = arith.constant 396 : index
    %49 = vector.load %arg10[%c0_35, %c396] : memref<1x592xf32, #tpu.memory_space<vmem>>, vector<1x32xf32>
    %50 = vector.broadcast %49 : vector<1x32xf32> to vector<16x32xf32>
    %51 = arith.addf %48, %50 : vector<16x32xf32>
    %cst_36 = arith.constant 0.000000e+00 : f32
    %52 = vector.broadcast %cst_36 : f32 to vector<16x32xf32>
    %53 = arith.maximumf %51, %52 : vector<16x32xf32>
    %c0_37 = arith.constant 0 : index
    %c268 = arith.constant 268 : index
    %54 = vector.load %arg8[%c0_37, %c268] : memref<32x300xbf16, #tpu.memory_space<vmem>>, vector<32x32xbf16>
    %55 = arith.truncf %53 : vector<16x32xf32> to vector<16x32xbf16>
    %cst_38 = arith.constant dense<0.000000e+00> : vector<16x32xf32>
    %56 = tpu.matmul %55, %54, %cst_38 {dimension_numbers = #tpu.dot_dimension_numbers<[1], [0], [0], [1], [0, 0, 1, 1], [], []>} : vector<16x32xbf16>, vector<32x32xbf16>, vector<16x32xf32> -> vector<16x32xf32>
    %c0_39 = arith.constant 0 : index
    %c428 = arith.constant 428 : index
    %57 = vector.load %arg10[%c0_39, %c428] : memref<1x592xf32, #tpu.memory_space<vmem>>, vector<1x32xf32>
    %58 = vector.broadcast %57 : vector<1x32xf32> to vector<16x32xf32>
    %59 = arith.addf %56, %58 : vector<16x32xf32>
    %60 = vector.extract_strided_slice %59 {offsets = [0, 0], sizes = [8, 32], strides = [1, 1]} : vector<16x32xf32> to vector<8x32xf32>
    %61 = vector.extract_strided_slice %59 {offsets = [8, 0], sizes = [8, 32], strides = [1, 1]} : vector<16x32xf32> to vector<8x32xf32>
    %62 = arith.addf %60, %61 : vector<8x32xf32>
    %63 = arith.maximumf %62, %60 : vector<8x32xf32>
    %64 = arith.maximumf %63, %61 : vector<8x32xf32>
    %65 = arith.subf %62, %64 : vector<8x32xf32>
    %66 = math.exp %65 : vector<8x32xf32>
    %cst_40 = arith.constant 2.000000e+00 : f32
    %67 = vector.broadcast %cst_40 : f32 to vector<8x32xf32>
    %68 = arith.mulf %67, %66 : vector<8x32xf32>
    %69 = arith.subf %60, %64 : vector<8x32xf32>
    %70 = math.exp %69 : vector<8x32xf32>
    %71 = arith.addf %68, %70 : vector<8x32xf32>
    %72 = arith.subf %61, %64 : vector<8x32xf32>
    %73 = math.exp %72 : vector<8x32xf32>
    %74 = arith.addf %71, %73 : vector<8x32xf32>
    %75 = math.log %74 : vector<8x32xf32>
    %76 = arith.addf %75, %64 : vector<8x32xf32>
    %cst_41 = arith.constant 0.000000e+00 : f32
    %77 = vector.broadcast %cst_41 : f32 to vector<8x32xf32>
    %78 = arith.maximumf %77, %60 : vector<8x32xf32>
    %79 = arith.maximumf %78, %61 : vector<8x32xf32>
    %cst_42 = arith.constant 0.000000e+00 : f32
    %80 = vector.broadcast %cst_42 : f32 to vector<8x32xf32>
    %81 = arith.subf %80, %79 : vector<8x32xf32>
    %82 = math.exp %81 : vector<8x32xf32>
    %cst_43 = arith.constant 2.000000e+00 : f32
    %83 = vector.broadcast %cst_43 : f32 to vector<8x32xf32>
    %84 = arith.mulf %83, %82 : vector<8x32xf32>
    %85 = arith.subf %60, %79 : vector<8x32xf32>
    %86 = math.exp %85 : vector<8x32xf32>
    %87 = arith.addf %84, %86 : vector<8x32xf32>
    %88 = arith.subf %61, %79 : vector<8x32xf32>
    %89 = math.exp %88 : vector<8x32xf32>
    %90 = arith.addf %87, %89 : vector<8x32xf32>
    %91 = math.log %90 : vector<8x32xf32>
    %92 = arith.addf %91, %79 : vector<8x32xf32>
    %93 = arith.subf %76, %92 : vector<8x32xf32>
    %94 = vector.broadcast %0 : vector<8x1xf32> to vector<8x32xf32>
    %95 = arith.mulf %94, %93 : vector<8x32xf32>
    %cst_44 = arith.constant 1.000000e+00 : f32
    %96 = vector.broadcast %cst_44 : f32 to vector<8x1xf32>
    %97 = arith.subf %96, %0 : vector<8x1xf32>
    %98 = vector.broadcast %97 : vector<8x1xf32> to vector<8x32xf32>
    %99 = arith.mulf %98, %60 : vector<8x32xf32>
    %100 = arith.addf %95, %99 : vector<8x32xf32>
    %101 = tpu.concatenate %14, %100, %36 in 0 : vector<8x32xf32>, vector<8x32xf32>, vector<8x32xf32> -> vector<24x32xf32>
    %c0_45 = arith.constant 0 : index
    %c0_46 = arith.constant 0 : index
    %102 = vector.load %arg8[%c0_45, %c0_46] : memref<32x300xbf16, #tpu.memory_space<vmem>>, vector<32x204xbf16>
    %103 = arith.truncf %101 : vector<24x32xf32> to vector<24x32xbf16>
    %cst_47 = arith.constant dense<0.000000e+00> : vector<24x204xf32>
    %104 = tpu.matmul %103, %102, %cst_47 {dimension_numbers = #tpu.dot_dimension_numbers<[1], [0], [0], [1], [0, 0, 1, 1], [], []>} : vector<24x32xbf16>, vector<32x204xbf16>, vector<24x204xf32> -> vector<24x204xf32>
    %c0_48 = arith.constant 0 : index
    %c128 = arith.constant 128 : index
    %105 = vector.load %arg10[%c0_48, %c128] : memref<1x592xf32, #tpu.memory_space<vmem>>, vector<1x204xf32>
    %106 = vector.broadcast %105 : vector<1x204xf32> to vector<24x204xf32>
    %107 = arith.addf %104, %106 : vector<24x204xf32>
    %108 = vector.extract_strided_slice %107 {offsets = [0, 0], sizes = [24, 128], strides = [1, 1]} : vector<24x204xf32> to vector<24x128xf32>
    %109 = vector.extract_strided_slice %107 {offsets = [0, 128], sizes = [24, 32], strides = [1, 1]} : vector<24x204xf32> to vector<24x32xf32>
    %110 = vector.extract_strided_slice %107 {offsets = [0, 160], sizes = [24, 32], strides = [1, 1]} : vector<24x204xf32> to vector<24x32xf32>
    %111 = vector.extract_strided_slice %107 {offsets = [0, 192], sizes = [24, 12], strides = [1, 1]} : vector<24x204xf32> to vector<24x12xf32>
    %112 = vector.extract_strided_slice %111 {offsets = [0, 0], sizes = [8, 4], strides = [1, 1]} : vector<24x12xf32> to vector<8x4xf32>
    %cst_49 = arith.constant 0.000000e+00 : f32
    %113 = vector.broadcast %cst_49 : f32 to vector<8x4xf32>
    %114 = arith.subf %113, %112 : vector<8x4xf32>
    %115 = math.exp %114 : vector<8x4xf32>
    %cst_50 = arith.constant 1.000000e+00 : f32
    %116 = vector.broadcast %cst_50 : f32 to vector<8x4xf32>
    %117 = arith.addf %116, %115 : vector<8x4xf32>
    %cst_51 = arith.constant 1.000000e+00 : f32
    %118 = vector.broadcast %cst_51 : f32 to vector<8x4xf32>
    %119 = arith.divf %118, %117 : vector<8x4xf32>
    %120 = vector.extract_strided_slice %111 {offsets = [8, 4], sizes = [8, 4], strides = [1, 1]} : vector<24x12xf32> to vector<8x4xf32>
    %cst_52 = arith.constant 0.000000e+00 : f32
    %121 = vector.broadcast %cst_52 : f32 to vector<8x4xf32>
    %122 = arith.subf %121, %120 : vector<8x4xf32>
    %123 = math.exp %122 : vector<8x4xf32>
    %cst_53 = arith.constant 1.000000e+00 : f32
    %124 = vector.broadcast %cst_53 : f32 to vector<8x4xf32>
    %125 = arith.addf %124, %123 : vector<8x4xf32>
    %cst_54 = arith.constant 1.000000e+00 : f32
    %126 = vector.broadcast %cst_54 : f32 to vector<8x4xf32>
    %127 = arith.divf %126, %125 : vector<8x4xf32>
    %128 = vector.extract_strided_slice %111 {offsets = [16, 8], sizes = [8, 4], strides = [1, 1]} : vector<24x12xf32> to vector<8x4xf32>
    %cst_55 = arith.constant 0.000000e+00 : f32
    %129 = vector.broadcast %cst_55 : f32 to vector<8x4xf32>
    %130 = arith.subf %129, %128 : vector<8x4xf32>
    %131 = math.exp %130 : vector<8x4xf32>
    %cst_56 = arith.constant 1.000000e+00 : f32
    %132 = vector.broadcast %cst_56 : f32 to vector<8x4xf32>
    %133 = arith.addf %132, %131 : vector<8x4xf32>
    %cst_57 = arith.constant 1.000000e+00 : f32
    %134 = vector.broadcast %cst_57 : f32 to vector<8x4xf32>
    %135 = arith.divf %134, %133 : vector<8x4xf32>
    %136 = vector.extract_strided_slice %109 {offsets = [0, 0], sizes = [8, 32], strides = [1, 1]} : vector<24x32xf32> to vector<8x32xf32>
    %137 = vector.extract_strided_slice %109 {offsets = [8, 0], sizes = [8, 32], strides = [1, 1]} : vector<24x32xf32> to vector<8x32xf32>
    %138 = vector.extract_strided_slice %109 {offsets = [16, 0], sizes = [8, 32], strides = [1, 1]} : vector<24x32xf32> to vector<8x32xf32>
    %139 = arith.addf %136, %137 : vector<8x32xf32>
    %140 = arith.addf %139, %138 : vector<8x32xf32>
    %cst_58 = arith.constant 0.333333343 : f32
    %141 = vector.broadcast %cst_58 : f32 to vector<8x32xf32>
    %142 = arith.mulf %140, %141 : vector<8x32xf32>
    %143 = vector.broadcast %0 : vector<8x1xf32> to vector<8x32xf32>
    %144 = arith.mulf %143, %142 : vector<8x32xf32>
    %cst_59 = arith.constant 1.000000e+00 : f32
    %145 = vector.broadcast %cst_59 : f32 to vector<8x1xf32>
    %146 = arith.subf %145, %0 : vector<8x1xf32>
    %147 = arith.addf %136, %137 : vector<8x32xf32>
    %cst_60 = arith.constant 5.000000e-01 : f32
    %148 = vector.broadcast %cst_60 : f32 to vector<8x32xf32>
    %149 = arith.mulf %147, %148 : vector<8x32xf32>
    %150 = vector.broadcast %146 : vector<8x1xf32> to vector<8x32xf32>
    %151 = arith.mulf %150, %149 : vector<8x32xf32>
    %152 = arith.addf %144, %151 : vector<8x32xf32>
    %153 = tpu.iota {dimensions = array<i32: 0>} : vector<128x4xi32>
    %154 = tpu.iota {dimensions = array<i32: 1>} : vector<128x4xi32>
    %c32_i32 = arith.constant 32 : i32
    %155 = vector.broadcast %c32_i32 : i32 to vector<128x4xi32>
    %156 = arith.muli %154, %155 : vector<128x4xi32>
    %157 = arith.cmpi sge, %153, %156 : vector<128x4xi32>
    %c32_i32_61 = arith.constant 32 : i32
    %158 = vector.broadcast %c32_i32_61 : i32 to vector<128x4xi32>
    %159 = arith.addi %156, %158 : vector<128x4xi32>
    %160 = arith.cmpi slt, %153, %159 : vector<128x4xi32>
    %161 = arith.andi %157, %160 : vector<128x4xi1>
    %162 = arith.extui %161 : vector<128x4xi1> to vector<128x4xi32>
    %163 = arith.sitofp %162 : vector<128x4xi32> to vector<128x4xf32>
    %164 = tpu.concatenate %152, %152, %152, %152 in 1 : vector<8x32xf32>, vector<8x32xf32>, vector<8x32xf32>, vector<8x32xf32> -> vector<8x128xf32>
    %165 = tpu.concatenate %164, %164, %164 in 0 : vector<8x128xf32>, vector<8x128xf32>, vector<8x128xf32> -> vector<24x128xf32>
    %166 = arith.mulf %108, %165 : vector<24x128xf32>
    %cst_62 = arith.constant dense<0.000000e+00> : vector<24x4xf32>
    %167 = tpu.matmul %166, %163, %cst_62 {dimension_numbers = #tpu.dot_dimension_numbers<[1], [0], [0], [1], [0, 0, 1, 1], [], []>} : vector<24x128xf32>, vector<128x4xf32>, vector<24x4xf32> -> vector<24x4xf32>
    %cst_63 = arith.constant 0.176776692 : f32
    %168 = vector.broadcast %cst_63 : f32 to vector<24x4xf32>
    %169 = arith.mulf %167, %168 : vector<24x4xf32>
    %170 = vector.extract_strided_slice %169 {offsets = [0, 0], sizes = [8, 4], strides = [1, 1]} : vector<24x4xf32> to vector<8x4xf32>
    %171 = vector.extract_strided_slice %169 {offsets = [8, 0], sizes = [8, 4], strides = [1, 1]} : vector<24x4xf32> to vector<8x4xf32>
    %cst_64 = arith.constant 5.000000e-01 : f32
    %172 = vector.broadcast %cst_64 : f32 to vector<8x1xf32>
    %173 = arith.cmpf ogt, %0, %172 : vector<8x1xf32>
    %174 = vector.extract_strided_slice %169 {offsets = [16, 0], sizes = [8, 4], strides = [1, 1]} : vector<24x4xf32> to vector<8x4xf32>
    %cst_65 = arith.constant -1.000000e+30 : f32
    %175 = vector.shape_cast %173 : vector<8x1xi1> to vector<8x1xi1>
    %176 = vector.broadcast %175 : vector<8x1xi1> to vector<8x4xi1>
    %177 = vector.broadcast %cst_65 : f32 to vector<8x4xf32>
    %178 = arith.select %176, %174, %177 : vector<8x4xi1>, vector<8x4xf32>
    %179 = arith.maximumf %170, %171 : vector<8x4xf32>
    %180 = arith.maximumf %179, %178 : vector<8x4xf32>
    %181 = arith.subf %170, %180 : vector<8x4xf32>
    %182 = math.exp %181 : vector<8x4xf32>
    %183 = arith.subf %171, %180 : vector<8x4xf32>
    %184 = math.exp %183 : vector<8x4xf32>
    %185 = arith.subf %178, %180 : vector<8x4xf32>
    %186 = math.exp %185 : vector<8x4xf32>
    %187 = arith.addf %182, %184 : vector<8x4xf32>
    %188 = arith.addf %187, %186 : vector<8x4xf32>
    %189 = arith.divf %182, %188 : vector<8x4xf32>
    %190 = arith.divf %184, %188 : vector<8x4xf32>
    %191 = arith.divf %186, %188 : vector<8x4xf32>
    %192 = vector.extract_strided_slice %110 {offsets = [0, 0], sizes = [8, 32], strides = [1, 1]} : vector<24x32xf32> to vector<8x32xf32>
    %193 = vector.extract_strided_slice %110 {offsets = [8, 0], sizes = [8, 32], strides = [1, 1]} : vector<24x32xf32> to vector<8x32xf32>
    %194 = vector.extract_strided_slice %110 {offsets = [16, 0], sizes = [8, 32], strides = [1, 1]} : vector<24x32xf32> to vector<8x32xf32>
    %195 = vector.extract_strided_slice %189 {offsets = [0, 0], sizes = [8, 1], strides = [1, 1]} : vector<8x4xf32> to vector<8x1xf32>
    %196 = vector.broadcast %195 : vector<8x1xf32> to vector<8x32xf32>
    %197 = arith.mulf %196, %192 : vector<8x32xf32>
    %198 = vector.extract_strided_slice %190 {offsets = [0, 0], sizes = [8, 1], strides = [1, 1]} : vector<8x4xf32> to vector<8x1xf32>
    %199 = vector.broadcast %198 : vector<8x1xf32> to vector<8x32xf32>
    %200 = arith.mulf %199, %193 : vector<8x32xf32>
    %201 = arith.addf %197, %200 : vector<8x32xf32>
    %202 = vector.extract_strided_slice %191 {offsets = [0, 0], sizes = [8, 1], strides = [1, 1]} : vector<8x4xf32> to vector<8x1xf32>
    %203 = vector.broadcast %202 : vector<8x1xf32> to vector<8x32xf32>
    %204 = arith.mulf %203, %194 : vector<8x32xf32>
    %205 = arith.addf %201, %204 : vector<8x32xf32>
    %206 = vector.extract_strided_slice %189 {offsets = [0, 1], sizes = [8, 1], strides = [1, 1]} : vector<8x4xf32> to vector<8x1xf32>
    %207 = vector.broadcast %206 : vector<8x1xf32> to vector<8x32xf32>
    %208 = arith.mulf %207, %192 : vector<8x32xf32>
    %209 = vector.extract_strided_slice %190 {offsets = [0, 1], sizes = [8, 1], strides = [1, 1]} : vector<8x4xf32> to vector<8x1xf32>
    %210 = vector.broadcast %209 : vector<8x1xf32> to vector<8x32xf32>
    %211 = arith.mulf %210, %193 : vector<8x32xf32>
    %212 = arith.addf %208, %211 : vector<8x32xf32>
    %213 = vector.extract_strided_slice %191 {offsets = [0, 1], sizes = [8, 1], strides = [1, 1]} : vector<8x4xf32> to vector<8x1xf32>
    %214 = vector.broadcast %213 : vector<8x1xf32> to vector<8x32xf32>
    %215 = arith.mulf %214, %194 : vector<8x32xf32>
    %216 = arith.addf %212, %215 : vector<8x32xf32>
    %217 = vector.extract_strided_slice %189 {offsets = [0, 2], sizes = [8, 1], strides = [1, 1]} : vector<8x4xf32> to vector<8x1xf32>
    %218 = vector.broadcast %217 : vector<8x1xf32> to vector<8x32xf32>
    %219 = arith.mulf %218, %192 : vector<8x32xf32>
    %220 = vector.extract_strided_slice %190 {offsets = [0, 2], sizes = [8, 1], strides = [1, 1]} : vector<8x4xf32> to vector<8x1xf32>
    %221 = vector.broadcast %220 : vector<8x1xf32> to vector<8x32xf32>
    %222 = arith.mulf %221, %193 : vector<8x32xf32>
    %223 = arith.addf %219, %222 : vector<8x32xf32>
    %224 = vector.extract_strided_slice %191 {offsets = [0, 2], sizes = [8, 1], strides = [1, 1]} : vector<8x4xf32> to vector<8x1xf32>
    %225 = vector.broadcast %224 : vector<8x1xf32> to vector<8x32xf32>
    %226 = arith.mulf %225, %194 : vector<8x32xf32>
    %227 = arith.addf %223, %226 : vector<8x32xf32>
    %228 = vector.extract_strided_slice %189 {offsets = [0, 3], sizes = [8, 1], strides = [1, 1]} : vector<8x4xf32> to vector<8x1xf32>
    %229 = vector.broadcast %228 : vector<8x1xf32> to vector<8x32xf32>
    %230 = arith.mulf %229, %192 : vector<8x32xf32>
    %231 = vector.extract_strided_slice %190 {offsets = [0, 3], sizes = [8, 1], strides = [1, 1]} : vector<8x4xf32> to vector<8x1xf32>
    %232 = vector.broadcast %231 : vector<8x1xf32> to vector<8x32xf32>
    %233 = arith.mulf %232, %193 : vector<8x32xf32>
    %234 = arith.addf %230, %233 : vector<8x32xf32>
    %235 = vector.extract_strided_slice %191 {offsets = [0, 3], sizes = [8, 1], strides = [1, 1]} : vector<8x4xf32> to vector<8x1xf32>
    %236 = vector.broadcast %235 : vector<8x1xf32> to vector<8x32xf32>
    %237 = arith.mulf %236, %194 : vector<8x32xf32>
    %238 = arith.addf %234, %237 : vector<8x32xf32>
    %239 = tpu.concatenate %205, %216, %227, %238 in 1 : vector<8x32xf32>, vector<8x32xf32>, vector<8x32xf32>, vector<8x32xf32> -> vector<8x128xf32>
    %c0_66 = arith.constant 0 : index
    %c464 = arith.constant 464 : index
    %240 = vector.load %arg10[%c0_66, %c464] : memref<1x592xf32, #tpu.memory_space<vmem>>, vector<1x128xf32>
    %241 = vector.broadcast %240 : vector<1x128xf32> to vector<8x128xf32>
    %242 = arith.mulf %239, %241 : vector<8x128xf32>
    %cst_67 = arith.constant dense<0.000000e+00> : vector<8x4xf32>
    %243 = tpu.matmul %242, %163, %cst_67 {dimension_numbers = #tpu.dot_dimension_numbers<[1], [0], [0], [1], [0, 0, 1, 1], [], []>} : vector<8x128xf32>, vector<128x4xf32>, vector<8x4xf32> -> vector<8x4xf32>
    %c0_68 = arith.constant 0 : index
    %c460 = arith.constant 460 : index
    %244 = vector.load %arg10[%c0_68, %c460] : memref<1x592xf32, #tpu.memory_space<vmem>>, vector<1x4xf32>
    %245 = vector.broadcast %244 : vector<1x4xf32> to vector<8x4xf32>
    %246 = arith.addf %243, %245 : vector<8x4xf32>
    %cst_69 = arith.constant 0.000000e+00 : f32
    %247 = vector.broadcast %cst_69 : f32 to vector<8x4xf32>
    %248 = arith.subf %247, %246 : vector<8x4xf32>
    %249 = math.exp %248 : vector<8x4xf32>
    %cst_70 = arith.constant 1.000000e+00 : f32
    %250 = vector.broadcast %cst_70 : f32 to vector<8x4xf32>
    %251 = arith.addf %250, %249 : vector<8x4xf32>
    %cst_71 = arith.constant 1.000000e+00 : f32
    %252 = vector.broadcast %cst_71 : f32 to vector<8x4xf32>
    %253 = arith.divf %252, %251 : vector<8x4xf32>
    %cst_72 = arith.constant 0.000000e+00 : f32
    %254 = vector.broadcast %cst_72 : f32 to vector<8x100xf32>
    %255 = tpu.concatenate %60, %61, %14, %36, %239, %253, %127, %119, %135, %189, %190, %191, %254 in 1 : vector<8x32xf32>, vector<8x32xf32>, vector<8x32xf32>, vector<8x32xf32>, vector<8x128xf32>, vector<8x4xf32>, vector<8x4xf32>, vector<8x4xf32>, vector<8x4xf32>, vector<8x4xf32>, vector<8x4xf32>, vector<8x4xf32>, vector<8x100xf32> -> vector<8x384xf32>
    %c0_73 = arith.constant 0 : index
    %c0_74 = arith.constant 0 : index
    %256 = vector.load %arg11[%c0_73, %c0_74] : memref<8x384xf32, #tpu.memory_space<vmem>>, vector<8x384xf32>
    tpu.vector_store %arg11[%c0_73, %c0_74], %255 {strides = array<i32>} : memref<8x384xf32, #tpu.memory_space<vmem>>, vector<8x384xf32>,
    return
  }
  func.func @transform_0(%arg0: i32) -> (i32, i32, i32) {
    %c0_i32 = arith.constant 0 : i32
    %c0_i32_0 = arith.constant 0 : i32
    %c0_i32_1 = arith.constant 0 : i32
    return %arg0, %c0_i32, %c0_i32_0 : i32, i32, i32
  }
  func.func @transform_1(%arg0: i32) -> (i32, i32, i32) {
    %c0_i32 = arith.constant 0 : i32
    %c0_i32_0 = arith.constant 0 : i32
    %c0_i32_1 = arith.constant 0 : i32
    return %arg0, %c0_i32, %c0_i32_0 : i32, i32, i32
  }
  func.func @transform_2(%arg0: i32) -> (i32, i32, i32, i32) {
    %c0_i32 = arith.constant 0 : i32
    %c0_i32_0 = arith.constant 0 : i32
    %c0_i32_1 = arith.constant 0 : i32
    %c0_i32_2 = arith.constant 0 : i32
    return %c0_i32, %arg0, %c0_i32_0, %c0_i32_1 : i32, i32, i32, i32
  }
  func.func @transform_3(%arg0: i32) -> (i32, i32, i32) {
    %c0_i32 = arith.constant 0 : i32
    %c0_i32_0 = arith.constant 0 : i32
    %c0_i32_1 = arith.constant 0 : i32
    return %arg0, %c0_i32, %c0_i32_0 : i32, i32, i32
  }
  func.func @transform_4(%arg0: i32) -> (i32, i32) {
    %c0_i32 = arith.constant 0 : i32
    %c0_i32_0 = arith.constant 0 : i32
    return %arg0, %c0_i32 : i32, i32
  }
  func.func @transform_5(%arg0: i32) -> (i32, i32) {
    %c0_i32 = arith.constant 0 : i32
    %c0_i32_0 = arith.constant 0 : i32
    %c0_i32_1 = arith.constant 0 : i32
    return %c0_i32, %c0_i32_0 : i32, i32
  }
  func.func @transform_6(%arg0: i32) -> (i32, i32) {
    %c0_i32 = arith.constant 0 : i32
    %c0_i32_0 = arith.constant 0 : i32
    %c0_i32_1 = arith.constant 0 : i32
    return %c0_i32, %c0_i32_0 : i32, i32
  }
  func.func @transform_7(%arg0: i32) -> (i32, i32) {
    %c0_i32 = arith.constant 0 : i32
    %c0_i32_0 = arith.constant 0 : i32
    %c0_i32_1 = arith.constant 0 : i32
    return %c0_i32, %c0_i32_0 : i32, i32
  }
  func.func @transform_8(%arg0: i32) -> (i32, i32) {
    %c0_i32 = arith.constant 0 : i32
    %c0_i32_0 = arith.constant 0 : i32
    %c0_i32_1 = arith.constant 0 : i32
    return %c0_i32, %c0_i32_0 : i32, i32
  }
  func.func @transform_9(%arg0: i32) -> (i32, i32) {
    %c0_i32 = arith.constant 0 : i32
    %c0_i32_0 = arith.constant 0 : i32
    %c0_i32_1 = arith.constant 0 : i32
    return %c0_i32, %c0_i32_0 : i32, i32
  }
  func.func @transform_10(%arg0: i32) -> (i32, i32) {
    %c0_i32 = arith.constant 0 : i32
    %c0_i32_0 = arith.constant 0 : i32
    return %arg0, %c0_i32 : i32, i32
  }
}

</mosaic_0001>

<llo_original>
// kernel: drfuse_forward.1
$region0: #{drfuse_forward.1}
  #allocation0 [shape = 'u32[]', space=smem, size = 0x4, offset = 0x4, fixed_abs, tag = 'smem constant byte address 0x4 - core index']
  #allocation1 [shape = 'u32[144,128]{1,0:T(1,128)}', space=vmem, size = 0x12000, scoped, tag = 'internal scratch']
  %s0 = inlined_call_operand.vmem [shape: bf16[8,8,76], index: 0, kind: input, shape index: {}]
  %s1 = inlined_call_operand.vmem [shape: f32[8,8,1], index: 1, kind: input, shape index: {}]
  %s2 = inlined_call_operand.vmem [shape: bf16[2,8,6,48], index: 2, kind: input, shape index: {}]
  %s3 = inlined_call_operand.vmem [shape: f32[8,6,1], index: 3, kind: input, shape index: {}]
  %s4 = inlined_call_operand.vmem [shape: f32[8,1], index: 4, kind: input, shape index: {}]
  %s5 = inlined_call_operand.vmem [shape: bf16[76,64], index: 5, kind: input, shape index: {}]
  %s6 = inlined_call_operand.vmem [shape: bf16[48,64], index: 6, kind: input, shape index: {}]
  %s7 = inlined_call_operand.vmem [shape: bf16[32,300], index: 7, kind: input, shape index: {}]
  %s8 = inlined_call_operand.vmem [shape: bf16[64,32], index: 8, kind: input, shape index: {}]
  %s9 = inlined_call_operand.vmem [shape: f32[1,592], index: 9, kind: input, shape index: {}]
  %s10 = inlined_call_operand.vmem [shape: f32[8,384], index: 10, kind: output, shape index: {}]
  %s11 = sld [smem:[#allocation0]]
  $region50: #{drfuse_forward.1} parent=0
    _
  %s13 = ssub.s32 1, %s11
  %s14 = scalar_select 0, %s13, %s11
  // Predicated region
  $region2: #{drfuse_forward.1} parent=0 // pred_check
    _
  $region3: #{drfuse_forward.1} parent=0 // pred_check_branch
    %16 = sbr.rel (0) target = $region5
  $region4: #{drfuse_forward.1} parent=0 // pred_region
    _
  $region5: #{drfuse_forward.1} parent=0 // pred_fallthru
    _
  // Predicated region
  $region6: #{drfuse_forward.1} parent=0 // pred_check
    _
  $region7: #{drfuse_forward.1} parent=0 // pred_check_branch
    %18 = sbr.rel (0) target = $region9
  $region8: #{drfuse_forward.1} parent=0 // pred_region
    _
  $region9: #{drfuse_forward.1} parent=0 // pred_fallthru
    _
  // Predicated region
  $region10: #{drfuse_forward.1} parent=0 // pred_check
    _
  $region11: #{drfuse_forward.1} parent=0 // pred_check_branch
    %20 = sbr.rel (0) target = $region13
  $region12: #{drfuse_forward.1} parent=0 // pred_region
    _
  $region13: #{drfuse_forward.1} parent=0 // pred_fallthru
    _
  // Predicated region
  $region14: #{drfuse_forward.1} parent=0 // pred_check
    _
  $region15: #{drfuse_forward.1} parent=0 // pred_check_branch
    %22 = sbr.rel (0) target = $region17
  $region16: #{drfuse_forward.1} parent=0 // pred_region
    _
  $region17: #{drfuse_forward.1} parent=0 // pred_fallthru
    _
  // Predicated region
  $region18: #{drfuse_forward.1} parent=0 // pred_check
    _
  $region19: #{drfuse_forward.1} parent=0 // pred_check_branch
    %24 = sbr.rel (0) target = $region21
  $region20: #{drfuse_forward.1} parent=0 // pred_region
    _
  $region21: #{drfuse_forward.1} parent=0 // pred_fallthru
    _
  // Predicated region
  $region22: #{drfuse_forward.1} parent=0 // pred_check
    _
  $region23: #{drfuse_forward.1} parent=0 // pred_check_branch
    %26 = sbr.rel (0) target = $region25
  $region24: #{drfuse_forward.1} parent=0 // pred_region
    _
  $region25: #{drfuse_forward.1} parent=0 // pred_fallthru
    _
  // Predicated region
  $region26: #{drfuse_forward.1} parent=0 // pred_check
    _
  $region27: #{drfuse_forward.1} parent=0 // pred_check_branch
    %28 = sbr.rel (0) target = $region29
  $region28: #{drfuse_forward.1} parent=0 // pred_region
    _
  $region29: #{drfuse_forward.1} parent=0 // pred_fallthru
    _
  // Predicated region
  $region30: #{drfuse_forward.1} parent=0 // pred_check
    _
  $region31: #{drfuse_forward.1} parent=0 // pred_check_branch
    %30 = sbr.rel (0) target = $region33
  $region32: #{drfuse_forward.1} parent=0 // pred_region
    _
  $region33: #{drfuse_forward.1} parent=0 // pred_fallthru
    _
  // Predicated region
  $region34: #{drfuse_forward.1} parent=0 // pred_check
    _
  $region35: #{drfuse_forward.1} parent=0 // pred_check_branch
    %32 = sbr.rel (0) target = $region37
  $region36: #{drfuse_forward.1} parent=0 // pred_region
    _
  $region37: #{drfuse_forward.1} parent=0 // pred_fallthru
    _
  // Predicated region
  $region38: #{drfuse_forward.1} parent=0 // pred_check
    _
  $region39: #{drfuse_forward.1} parent=0 // pred_check_branch
    %34 = sbr.rel (0) target = $region41
  $region40: #{drfuse_forward.1} parent=0 // pred_region
    _
  $region41: #{drfuse_forward.1} parent=0 // pred_fallthru
    _
  %v36 = vld [vmem:[%s4] sm:$0xff]
  %v37 = vld [vmem:[%s0] sm:$0xf]
  %v38 = vld [vmem:[%s0 + $0x4] sm:$0xf]
  %v39 = vld [vmem:[%s0 + $0x8] sm:$0xf]
  %v40 = vld [vmem:[%s0 + $0xc] sm:$0xf]
  %v41 = vld [vmem:[%s0 + $0x10] sm:$0xf]
  %v42 = vld [vmem:[%s0 + $0x14] sm:$0xf]
  %v43 = vld [vmem:[%s0 + $0x18] sm:$0xf]
  %v44 = vld [vmem:[%s0 + $0x1c] sm:$0xf]
  %v45 = vunpack.c.l.bf16 %v37
  %v46 = vunpack.c.l.bf16 %v38
  %v47 = vunpack.c.l.bf16 %v39
  %v48 = vunpack.c.l.bf16 %v40
  %v49 = vunpack.c.l.bf16 %v41
  %v50 = vunpack.c.l.bf16 %v42
  %v51 = vunpack.c.l.bf16 %v43
  %v52 = vunpack.c.l.bf16 %v44
  %v53 = vld [vmem:[%s1] sm:$0xff]
  %v54 = vld [vmem:[%s1 + $0x8] sm:$0xff]
  %v55 = vld [vmem:[%s1 + $0x10] sm:$0xff]
  %v56 = vld [vmem:[%s1 + $0x18] sm:$0xff]
  %v57 = vld [vmem:[%s1 + $0x20] sm:$0xff]
  %v58 = vld [vmem:[%s1 + $0x28] sm:$0xff]
  %v59 = vld [vmem:[%s1 + $0x30] sm:$0xff]
  %v60 = vld [vmem:[%s1 + $0x38] sm:$0xff]
  %62 = vset.pattern.permute.xlu0 0
  %63 = vperm.xlu0 %62, %v53
  %v64 = vpop.permute.xlu0 %63
  %67 = vset.pattern.permute.xlu0 0
  %68 = vperm.xlu0 %67, %v54
  %v69 = vpop.permute.xlu0 %68
  %72 = vset.pattern.permute.xlu0 0
  %73 = vperm.xlu0 %72, %v55
  %v74 = vpop.permute.xlu0 %73
  %77 = vset.pattern.permute.xlu0 0
  %78 = vperm.xlu0 %77, %v56
  %v79 = vpop.permute.xlu0 %78
  %82 = vset.pattern.permute.xlu0 0
  %83 = vperm.xlu0 %82, %v57
  %v84 = vpop.permute.xlu0 %83
  %87 = vset.pattern.permute.xlu0 0
  %88 = vperm.xlu0 %87, %v58
  %v89 = vpop.permute.xlu0 %88
  %92 = vset.pattern.permute.xlu0 0
  %93 = vperm.xlu0 %92, %v59
  %v94 = vpop.permute.xlu0 %93
  %97 = vset.pattern.permute.xlu0 0
  %98 = vperm.xlu0 %97, %v60
  %v99 = vpop.permute.xlu0 %98
  %v101 = vmul.f32 %v45, %v64
  %v102 = vmul.f32 %v46, %v69
  %v103 = vmul.f32 %v47, %v74
  %v104 = vmul.f32 %v48, %v79
  %v105 = vmul.f32 %v49, %v84
  %v106 = vmul.f32 %v50, %v89
  %v107 = vmul.f32 %v51, %v94
  %v108 = vmul.f32 %v52, %v99
  %vm109 = vcmask 621568
  %v110 = vsel %vm109, %v101, 0.0
  %v111 = vrot.slane %v110, 4
  %v112 = vadd.f32 %v110, %v111
  %v113 = vrot.slane %v112, 2
  %v114 = vadd.f32 %v112, %v113
  %v115 = vrot.slane %v114, 1
  %v116 = vadd.f32 %v114, %v115
  %v117 = vsel %vm109, %v102, 0.0
  %v118 = vrot.slane %v117, 4
  %v119 = vadd.f32 %v117, %v118
  %v120 = vrot.slane %v119, 2
  %v121 = vadd.f32 %v119, %v120
  %v122 = vrot.slane %v121, 1
  %v123 = vadd.f32 %v121, %v122
  %v124 = vsel %vm109, %v103, 0.0
  %v125 = vrot.slane %v124, 4
  %v126 = vadd.f32 %v124, %v125
  %v127 = vrot.slane %v126, 2
  %v128 = vadd.f32 %v126, %v127
  %v129 = vrot.slane %v128, 1
  %v130 = vadd.f32 %v128, %v129
  %v131 = vsel %vm109, %v104, 0.0
  %v132 = vrot.slane %v131, 4
  %v133 = vadd.f32 %v131, %v132
  %v134 = vrot.slane %v133, 2
  %v135 = vadd.f32 %v133, %v134
  %v136 = vrot.slane %v135, 1
  %v137 = vadd.f32 %v135, %v136
  %v138 = vsel %vm109, %v105, 0.0
  %v139 = vrot.slane %v138, 4
  %v140 = vadd.f32 %v138, %v139
  %v141 = vrot.slane %v140, 2
  %v142 = vadd.f32 %v140, %v141
  %v143 = vrot.slane %v142, 1
  %v144 = vadd.f32 %v142, %v143
  %v145 = vsel %vm109, %v106, 0.0
  %v146 = vrot.slane %v145, 4
  %v147 = vadd.f32 %v145, %v146
  %v148 = vrot.slane %v147, 2
  %v149 = vadd.f32 %v147, %v148
  %v150 = vrot.slane %v149, 1
  %v151 = vadd.f32 %v149, %v150
  %v152 = vsel %vm109, %v107, 0.0
  %v153 = vrot.slane %v152, 4
  %v154 = vadd.f32 %v152, %v153
  %v155 = vrot.slane %v154, 2
  %v156 = vadd.f32 %v154, %v155
  %v157 = vrot.slane %v156, 1
  %v158 = vadd.f32 %v156, %v157
  %v159 = vsel %vm109, %v108, 0.0
  %v160 = vrot.slane %v159, 4
  %v161 = vadd.f32 %v159, %v160
  %v162 = vrot.slane %v161, 2
  %v163 = vadd.f32 %v161, %v162
  %v164 = vrot.slane %v163, 1
  %v165 = vadd.f32 %v163, %v164
  %v166 = vld [vmem:[%s5] sm:$0xf]
  %v167 = vld [vmem:[%s5 + $0x4] sm:$0xf]
  %v168 = vld [vmem:[%s5 + $0x8] sm:$0xf]
  %v169 = vld [vmem:[%s5 + $0xc] sm:$0xf]
  %v170 = vld [vmem:[%s5 + $0x10] sm:$0xf]
  %v171 = vld [vmem:[%s5 + $0x14] sm:$0xf]
  %v172 = vld [vmem:[%s5 + $0x18] sm:$0xf]
  %v173 = vld [vmem:[%s5 + $0x1c] sm:$0xf]
  %v174 = vld [vmem:[%s5 + $0x20] sm:$0xf]
  %v175 = vld [vmem:[%s5 + $0x24] sm:$0x3]
  %v176 = vpack.c.bf16 %v116, %v116
  %v177 = vpack.c.bf16 %v123, %v123
  %v178 = vpack.c.bf16 %v130, %v130
  %v179 = vpack.c.bf16 %v137, %v137
  %v180 = vpack.c.bf16 %v144, %v144
  %v181 = vpack.c.bf16 %v151, %v151
  %v182 = vpack.c.bf16 %v158, %v158
  %v183 = vpack.c.bf16 %v165, %v165
  %v184 = vld [vmem:[%s9] sm:$0x1]
  %v186 = vlaneseq
  %v187 = vshrl.u32 %v186, 7
  %v188 = vsub.s32 0, %v187
  %v189 = vrot.slane %v184, %v188
  %v199 = vunpack.c.l.b16 %v176
  %v200 = vunpack.c.l.b16 %v177
  %v201 = vunpack.c.l.b16 %v178
  %v202 = vunpack.c.l.b16 %v179
  %v203 = vunpack.c.l.b16 %v180
  %v204 = vunpack.c.l.b16 %v181
  %v205 = vunpack.c.l.b16 %v182
  %v206 = vunpack.c.l.b16 %v183
  %vm207 = vcmask 1041409
  %v208 = vsel %vm207, %v200, %v199
  %vm209 = vcmask 1042434
  %v210 = vsel %vm209, %v201, %v208
  %vm211 = vcmask 1043459
  %v212 = vsel %vm211, %v202, %v210
  %vm213 = vcmask 1044484
  %v214 = vsel %vm213, %v203, %v212
  %vm215 = vcmask 1045509
  %v216 = vsel %vm215, %v204, %v214
  %vm217 = vcmask 1046534
  %v218 = vsel %vm217, %v205, %v216
  %vm219 = vcmask 1047559
  %v220 = vsel %vm219, %v206, %v218
  %v221 = vpack.c.b16 %v220, %v220
  %v232 = vunpack.c.l.b16 %v166
  %v233 = vunpack.c.l.b16 %v167
  %v234 = vunpack.c.l.b16 %v168
  %v235 = vunpack.c.l.b16 %v169
  %v236 = vunpack.c.l.b16 %v170
  %v237 = vunpack.c.l.b16 %v171
  %v238 = vunpack.c.l.b16 %v172
  %v239 = vunpack.c.l.b16 %v173
  %v240 = vunpack.c.l.b16 %v174
  %v241 = vunpack.c.l.b16 %v175
  %v242 = vpack.c.b16 %v233, %v232
  %v243 = vpack.c.b16 %v235, %v234
  %v244 = vpack.c.b16 %v237, %v236
  %v245 = vpack.c.b16 %v239, %v238
  %v246 = vpack.c.b16 %v241, %v240
  %v252 = vsel %vm109, %v221, 0
  %vm254 = vcmask 1045504
  %v256 = vsel %vm254, %v246, 0
  %258 = vmatprep.subr.bf16.mxu0 0
  %259 = vmatpush1.bf16.msra.mxu0 %v242
  %260 = vmatprep.subr.bf16.mxu0 0
  %261 = vmatpush1.bf16.msra.mxu0 %v243
  %262 = vmatprep.subr.bf16.mxu0 0
  %263 = vmatpush1.bf16.msra.mxu0 %v244
  %264 = vmatprep.subr.bf16.mxu0 0
  %265 = vmatpush1.bf16.msra.mxu0 %v245
  %266 = vmatprep.subr.bf16.mxu0 0
  %267 = vmatpush1.bf16.msra.mxu0 %v256
  %268 = vmatprep.subr.bf16.mxu0 0
  %269 = vmatpush1.bf16.msra.mxu0 0
  %270 = vmatprep.subr.bf16.mxu0 0
  %271 = vmatpush1.bf16.msra.mxu0 0
  %272 = vmatprep.subr.bf16.mxu0 0
  %273 = vmatpush1.bf16.msra.mxu0 0
  %274 = vmatprep.subr.bf16.mxu0 0
  %275 = vmatpush1.bf16.msra.mxu0 0
  %276 = vmatprep.subr.bf16.mxu0 0
  %277 = vmatpush1.bf16.msra.mxu0 0
  %278 = vmatprep.subr.bf16.mxu0 0
  %279 = vmatpush1.bf16.msra.mxu0 0
  %280 = vmatprep.subr.bf16.mxu0 0
  %281 = vmatpush1.bf16.msra.mxu0 0
  %282 = vmatprep.subr.bf16.mxu0 0
  %283 = vmatpush1.bf16.msra.mxu0 0
  %284 = vmatprep.subr.bf16.mxu0 0
  %285 = vmatpush1.bf16.msra.mxu0 0
  %286 = vmatprep.subr.bf16.mxu0 0
  %287 = vmatpush1.bf16.msra.mxu0 0
  %288 = vmatprep.subr.bf16.mxu0 0
  %289 = vmatpush1.bf16.msra.mxu0 0
  %290 = vmatprep.mubr.bf16.mxu0 0
  %291 = vmatmul.mubr.bf16.gmra.mrb[0].mxu0 %v252
  %v292 = vpop.f32.mrb[0].mxu0
  %v293 = vadd.f32 %v189, %v292
  %v294 = vpop.f32.mrb[0].mxu0
  %v295 = vpop.f32.mrb[0].mxu0
  %v296 = vpop.f32.mrb[0].mxu0
  %297 = vdwg.mxu0
  %v298 = vld [vmem:[%s3] sm:$0x3f]
  %v299 = vld [vmem:[%s3 + $0x8] sm:$0x3f]
  %v300 = vld [vmem:[%s3 + $0x10] sm:$0x3f]
  %v301 = vld [vmem:[%s3 + $0x18] sm:$0x3f]
  %v302 = vld [vmem:[%s3 + $0x20] sm:$0x3f]
  %v303 = vld [vmem:[%s3 + $0x28] sm:$0x3f]
  %v304 = vld [vmem:[%s3 + $0x30] sm:$0x3f]
  %v305 = vld [vmem:[%s3 + $0x38] sm:$0x3f]
  %v306 = vld [vmem:[%s2] sm:$0x7]
  %v307 = vld [vmem:[%s2 + $0x4] sm:$0x7]
  %v308 = vld [vmem:[%s2 + $0x8] sm:$0x7]
  %v309 = vld [vmem:[%s2 + $0xc] sm:$0x7]
  %v310 = vld [vmem:[%s2 + $0x10] sm:$0x7]
  %v311 = vld [vmem:[%s2 + $0x14] sm:$0x7]
  %v312 = vld [vmem:[%s2 + $0x18] sm:$0x7]
  %v313 = vld [vmem:[%s2 + $0x1c] sm:$0x7]
  %v314 = vunpack.c.l.bf16 %v306
  %v315 = vunpack.c.l.bf16 %v307
  %v316 = vunpack.c.l.bf16 %v308
  %v317 = vunpack.c.l.bf16 %v309
  %v318 = vunpack.c.l.bf16 %v310
  %v319 = vunpack.c.l.bf16 %v311
  %v320 = vunpack.c.l.bf16 %v312
  %v321 = vunpack.c.l.bf16 %v313
  %323 = vset.pattern.permute.xlu0 0
  %324 = vperm.xlu0 %323, %v298
  %v325 = vpop.permute.xlu0 %324
  %328 = vset.pattern.permute.xlu0 0
  %329 = vperm.xlu0 %328, %v299
  %v330 = vpop.permute.xlu0 %329
  %333 = vset.pattern.permute.xlu0 0
  %334 = vperm.xlu0 %333, %v300
  %v335 = vpop.permute.xlu0 %334
  %338 = vset.pattern.permute.xlu0 0
  %339 = vperm.xlu0 %338, %v301
  %v340 = vpop.permute.xlu0 %339
  %343 = vset.pattern.permute.xlu0 0
  %344 = vperm.xlu0 %343, %v302
  %v345 = vpop.permute.xlu0 %344
  %348 = vset.pattern.permute.xlu0 0
  %349 = vperm.xlu0 %348, %v303
  %v350 = vpop.permute.xlu0 %349
  %353 = vset.pattern.permute.xlu0 0
  %354 = vperm.xlu0 %353, %v304
  %v355 = vpop.permute.xlu0 %354
  %358 = vset.pattern.permute.xlu0 0
  %359 = vperm.xlu0 %358, %v305
  %v360 = vpop.permute.xlu0 %359
  %v362 = vmul.f32 %v314, %v325
  %v363 = vmul.f32 %v315, %v330
  %v364 = vmul.f32 %v316, %v335
  %v365 = vmul.f32 %v317, %v340
  %v366 = vmul.f32 %v318, %v345
  %v367 = vmul.f32 %v319, %v350
  %v368 = vmul.f32 %v320, %v355
  %v369 = vmul.f32 %v321, %v360
  %vm370 = vcmask 390144
  %v371 = vsel %vm370, %v362, 0.0
  %v372 = vrot.slane %v371, 4
  %v373 = vadd.f32 %v371, %v372
  %v374 = vrot.slane %v373, 2
  %v375 = vadd.f32 %v373, %v374
  %v376 = vrot.slane %v375, 1
  %v377 = vadd.f32 %v375, %v376
  %v378 = vsel %vm370, %v363, 0.0
  %v379 = vrot.slane %v378, 4
  %v380 = vadd.f32 %v378, %v379
  %v381 = vrot.slane %v380, 2
  %v382 = vadd.f32 %v380, %v381
  %v383 = vrot.slane %v382, 1
  %v384 = vadd.f32 %v382, %v383
  %v385 = vsel %vm370, %v364, 0.0
  %v386 = vrot.slane %v385, 4
  %v387 = vadd.f32 %v385, %v386
  %v388 = vrot.slane %v387, 2
  %v389 = vadd.f32 %v387, %v388
  %v390 = vrot.slane %v389, 1
  %v391 = vadd.f32 %v389, %v390
  %v392 = vsel %vm370, %v365, 0.0
  %v393 = vrot.slane %v392, 4
  %v394 = vadd.f32 %v392, %v393
  %v395 = vrot.slane %v394, 2
  %v396 = vadd.f32 %v394, %v395
  %v397 = vrot.slane %v396, 1
  %v398 = vadd.f32 %v396, %v397
  %v399 = vsel %vm370, %v366, 0.0
  %v400 = vrot.slane %v399, 4
  %v401 = vadd.f32 %v399, %v400
  %v402 = vrot.slane %v401, 2
  %v403 = vadd.f32 %v401, %v402
  %v404 = vrot.slane %v403, 1
  %v405 = vadd.f32 %v403, %v404
  %v406 = vsel %vm370, %v367, 0.0
  %v407 = vrot.slane %v406, 4
  %v408 = vadd.f32 %v406, %v407
  %v409 = vrot.slane %v408, 2
  %v410 = vadd.f32 %v408, %v409
  %v411 = vrot.slane %v410, 1
  %v412 = vadd.f32 %v410, %v411
  %v413 = vsel %vm370, %v368, 0.0
  %v414 = vrot.slane %v413, 4
  %v415 = vadd.f32 %v413, %v414
  %v416 = vrot.slane %v415, 2
  %v417 = vadd.f32 %v415, %v416
  %v418 = vrot.slane %v417, 1
  %v419 = vadd.f32 %v417, %v418
  %v420 = vsel %vm370, %v369, 0.0
  %v421 = vrot.slane %v420, 4
  %v422 = vadd.f32 %v420, %v421
  %v423 = vrot.slane %v422, 2
  %v424 = vadd.f32 %v422, %v423
  %v425 = vrot.slane %v424, 1
  %v426 = vadd.f32 %v424, %v425
  %s427 = scalar_lea.vmem %s2, 32
  %v428 = vld [vmem:[%s427] sm:$0x7]
  %v429 = vld [vmem:[%s427 + $0x4] sm:$0x7]
  %v430 = vld [vmem:[%s427 + $0x8] sm:$0x7]
  %v431 = vld [vmem:[%s427 + $0xc] sm:$0x7]
  %v432 = vld [vmem:[%s427 + $0x10] sm:$0x7]
  %v433 = vld [vmem:[%s427 + $0x14] sm:$0x7]
  %v434 = vld [vmem:[%s427 + $0x18] sm:$0x7]
  %v435 = vld [vmem:[%s427 + $0x1c] sm:$0x7]
  %v436 = vunpack.c.l.bf16 %v428
  %v437 = vunpack.c.l.bf16 %v429
  %v438 = vunpack.c.l.bf16 %v430
  %v439 = vunpack.c.l.bf16 %v431
  %v440 = vunpack.c.l.bf16 %v432
  %v441 = vunpack.c.l.bf16 %v433
  %v442 = vunpack.c.l.bf16 %v434
  %v443 = vunpack.c.l.bf16 %v435
  %v444 = vmul.f32 %v436, %v325
  %v445 = vmul.f32 %v437, %v330
  %v446 = vmul.f32 %v438, %v335
  %v447 = vmul.f32 %v439, %v340
  %v448 = vmul.f32 %v440, %v345
  %v449 = vmul.f32 %v441, %v350
  %v450 = vmul.f32 %v442, %v355
  %v451 = vmul.f32 %v443, %v360
  %v452 = vsel %vm370, %v444, 0.0
  %v453 = vrot.slane %v452, 4
  %v454 = vadd.f32 %v452, %v453
  %v455 = vrot.slane %v454, 2
  %v456 = vadd.f32 %v454, %v455
  %v457 = vrot.slane %v456, 1
  %v458 = vadd.f32 %v456, %v457
  %v459 = vsel %vm370, %v445, 0.0
  %v460 = vrot.slane %v459, 4
  %v461 = vadd.f32 %v459, %v460
  %v462 = vrot.slane %v461, 2
  %v463 = vadd.f32 %v461, %v462
  %v464 = vrot.slane %v463, 1
  %v465 = vadd.f32 %v463, %v464
  %v466 = vsel %vm370, %v446, 0.0
  %v467 = vrot.slane %v466, 4
  %v468 = vadd.f32 %v466, %v467
  %v469 = vrot.slane %v468, 2
  %v470 = vadd.f32 %v468, %v469
  %v471 = vrot.slane %v470, 1
  %v472 = vadd.f32 %v470, %v471
  %v473 = vsel %vm370, %v447, 0.0
  %v474 = vrot.slane %v473, 4
  %v475 = vadd.f32 %v473, %v474
  %v476 = vrot.slane %v475, 2
  %v477 = vadd.f32 %v475, %v476
  %v478 = vrot.slane %v477, 1
  %v479 = vadd.f32 %v477, %v478
  %v480 = vsel %vm370, %v448, 0.0
  %v481 = vrot.slane %v480, 4
  %v482 = vadd.f32 %v480, %v481
  %v483 = vrot.slane %v482, 2
  %v484 = vadd.f32 %v482, %v483
  %v485 = vrot.slane %v484, 1
  %v486 = vadd.f32 %v484, %v485
  %v487 = vsel %vm370, %v449, 0.0
  %v488 = vrot.slane %v487, 4
  %v489 = vadd.f32 %v487, %v488
  %v490 = vrot.slane %v489, 2
  %v491 = vadd.f32 %v489, %v490
  %v492 = vrot.slane %v491, 1
  %v493 = vadd.f32 %v491, %v492
  %v494 = vsel %vm370, %v450, 0.0
  %v495 = vrot.slane %v494, 4
  %v496 = vadd.f32 %v494, %v495
  %v497 = vrot.slane %v496, 2
  %v498 = vadd.f32 %v496, %v497
  %v499 = vrot.slane %v498, 1
  %v500 = vadd.f32 %v498, %v499
  %v501 = vsel %vm370, %v451, 0.0
  %v502 = vrot.slane %v501, 4
  %v503 = vadd.f32 %v501, %v502
  %v504 = vrot.slane %v503, 2
  %v505 = vadd.f32 %v503, %v504
  %v506 = vrot.slane %v505, 1
  %v507 = vadd.f32 %v505, %v506
  %v516 = vsel %vm207, %v384, %v377
  %v517 = vsel %vm209, %v391, %v516
  %v518 = vsel %vm211, %v398, %v517
  %v519 = vsel %vm213, %v405, %v518
  %v520 = vsel %vm215, %v412, %v519
  %v521 = vsel %vm217, %v419, %v520
  %v522 = vsel %vm219, %v426, %v521
  %v532 = vsel %vm207, %v465, %v458
  %v533 = vsel %vm209, %v472, %v532
  %v534 = vsel %vm211, %v479, %v533
  %v535 = vsel %vm213, %v486, %v534
  %v536 = vsel %vm215, %v493, %v535
  %v537 = vsel %vm217, %v500, %v536
  %v538 = vsel %vm219, %v507, %v537
  %v540 = vld [vmem:[%s6] sm:$0xf]
  %v541 = vld [vmem:[%s6 + $0x4] sm:$0xf]
  %v542 = vld [vmem:[%s6 + $0x8] sm:$0xf]
  %v543 = vld [vmem:[%s6 + $0xc] sm:$0xf]
  %v544 = vld [vmem:[%s6 + $0x10] sm:$0xf]
  %v545 = vld [vmem:[%s6 + $0x14] sm:$0xf]
  %v546 = vpack.c.bf16 %v538, %v522
  %v553 = vunpack.c.l.b16 %v540
  %v554 = vunpack.c.l.b16 %v541
  %v555 = vunpack.c.l.b16 %v542
  %v556 = vunpack.c.l.b16 %v543
  %v557 = vunpack.c.l.b16 %v544
  %v558 = vunpack.c.l.b16 %v545
  %v559 = vpack.c.b16 %v554, %v553
  %v560 = vpack.c.b16 %v556, %v555
  %v561 = vpack.c.b16 %v558, %v557
  %565 = vrot.lane.b32.xlu0 %v189, 64
  %v566 = vpop.permute.xlu0 %565
  %vm568 = vcmask 392192
  %v570 = vsel %vm568, %v546, 0
  %572 = vmatprep.subr.bf16.mxu0 0
  %573 = vmatpush1.bf16.msra.mxu0 %v559
  %574 = vmatprep.subr.bf16.mxu0 0
  %575 = vmatpush1.bf16.msra.mxu0 %v560
  %576 = vmatprep.subr.bf16.mxu0 0
  %577 = vmatpush1.bf16.msra.mxu0 %v561
  %578 = vmatprep.subr.bf16.mxu0 0
  %579 = vmatpush1.bf16.msra.mxu0 0
  %580 = vmatprep.subr.bf16.mxu0 0
  %581 = vmatpush1.bf16.msra.mxu0 0
  %582 = vmatprep.subr.bf16.mxu0 0
  %583 = vmatpush1.bf16.msra.mxu0 0
  %584 = vmatprep.subr.bf16.mxu0 0
  %585 = vmatpush1.bf16.msra.mxu0 0
  %586 = vmatprep.subr.bf16.mxu0 0
  %587 = vmatpush1.bf16.msra.mxu0 0
  %588 = vmatprep.subr.bf16.mxu0 0
  %589 = vmatpush1.bf16.msra.mxu0 0
  %590 = vmatprep.subr.bf16.mxu0 0
  %591 = vmatpush1.bf16.msra.mxu0 0
  %592 = vmatprep.subr.bf16.mxu0 0
  %593 = vmatpush1.bf16.msra.mxu0 0
  %594 = vmatprep.subr.bf16.mxu0 0
  %595 = vmatpush1.bf16.msra.mxu0 0
  %596 = vmatprep.subr.bf16.mxu0 0
  %597 = vmatpush1.bf16.msra.mxu0 0
  %598 = vmatprep.subr.bf16.mxu0 0
  %599 = vmatpush1.bf16.msra.mxu0 0
  %600 = vmatprep.subr.bf16.mxu0 0
  %601 = vmatpush1.bf16.msra.mxu0 0
  %602 = vmatprep.subr.bf16.mxu0 0
  %603 = vmatpush1.bf16.msra.mxu0 0
  %604 = vmatprep.mubr.bf16.mxu0 0
  %605 = vmatmul.mubr.bf16.gmra.mrb[0].mxu0 %v570
  %v606 = vpop.f32.mrb[0].mxu0
  %v607 = vadd.f32 %v566, %v606
  %v608 = vpop.f32.mrb[0].mxu0
  %v609 = vpop.f32.mrb[0].mxu0
  %v610 = vadd.f32 %v566, %v609
  %v611 = vpop.f32.mrb[0].mxu0
  %612 = vdwg.mxu0
  %v613 = vld [vmem:[%s7 + $0x4] sm:$0xff]
  %v614 = vld [vmem:[%s7 + $0x10] sm:$0xff]
  %v615 = vld [vmem:[%s7 + $0x1c] sm:$0xff]
  %v616 = vld [vmem:[%s7 + $0x28] sm:$0xff]
  %v617 = vpack.c.bf16 %v607, %v293
  %v618 = vld [vmem:[%s9 + $0x2] sm:$0x3]
  %v620 = vlaneseq
  %v621 = vshrl.u32 %v620, 7
  %v622 = vsub.s32 0, %v621
  %v623 = vrot.slane %v618, %v622
  %v624 = vlaneseq
  %v625 = vshrl.u32 %v624, 7
  %v626 = vsub.s32 1, %v625
  %v627 = vrot.slane %v618, %v626
  %v632 = vunpack.c.l.b16 %v613
  %v633 = vunpack.c.h.b16 %v613
  %v634 = vunpack.c.l.b16 %v614
  %v635 = vunpack.c.h.b16 %v614
  %v636 = vunpack.c.l.b16 %v615
  %v637 = vunpack.c.h.b16 %v615
  %v638 = vunpack.c.l.b16 %v616
  %v639 = vunpack.c.h.b16 %v616
  %v640 = vpack.c.b16 %v634, %v632
  %v641 = vpack.c.b16 %v635, %v633
  %v642 = vpack.c.b16 %v638, %v636
  %v643 = vpack.c.b16 %v639, %v637
  %644 = vrot.lane.b32.xlu0 %v640, 52
  %v645 = vpop.permute.xlu0 %644
  %646 = vrot.lane.b32.xlu0 %v641, 52
  %v647 = vpop.permute.xlu0 %646
  %648 = vrot.lane.b32.xlu0 %v642, 52
  %v649 = vpop.permute.xlu0 %648
  %650 = vrot.lane.b32.xlu0 %v643, 52
  %v651 = vpop.permute.xlu0 %650
  %vm652 = vcmask 424960
  %v653 = vsel %vm652, %v645, %v647
  %v654 = vsel %vm652, %v649, %v651
  %657 = vrot.lane.b32.xlu0 %v623, 52
  %v658 = vpop.permute.xlu0 %657
  %659 = vrot.lane.b32.xlu0 %v627, 52
  %v660 = vpop.permute.xlu0 %659
  %vm661 = vcmask 424960
  %v662 = vsel %vm661, %v658, %v660
  %vm664 = vcmask 261120
  %v666 = vsel %vm664, %v617, 0
  %668 = vmatprep.subr.bf16.mxu0 0
  %669 = vmatpush1.bf16.msra.mxu0 %v653
  %670 = vmatprep.subr.bf16.mxu0 0
  %671 = vmatpush1.bf16.msra.mxu0 %v654
  %672 = vmatprep.subr.bf16.mxu0 0
  %673 = vmatpush1.bf16.msra.mxu0 0
  %674 = vmatprep.subr.bf16.mxu0 0
  %675 = vmatpush1.bf16.msra.mxu0 0
  %676 = vmatprep.subr.bf16.mxu0 0
  %677 = vmatpush1.bf16.msra.mxu0 0
  %678 = vmatprep.subr.bf16.mxu0 0
  %679 = vmatpush1.bf16.msra.mxu0 0
  %680 = vmatprep.subr.bf16.mxu0 0
  %681 = vmatpush1.bf16.msra.mxu0 0
  %682 = vmatprep.subr.bf16.mxu0 0
  %683 = vmatpush1.bf16.msra.mxu0 0
  %684 = vmatprep.subr.bf16.mxu0 0
  %685 = vmatpush1.bf16.msra.mxu0 0
  %686 = vmatprep.subr.bf16.mxu0 0
  %687 = vmatpush1.bf16.msra.mxu0 0
  %688 = vmatprep.subr.bf16.mxu0 0
  %689 = vmatpush1.bf16.msra.mxu0 0
  %690 = vmatprep.subr.bf16.mxu0 0
  %691 = vmatpush1.bf16.msra.mxu0 0
  %692 = vmatprep.subr.bf16.mxu0 0
  %693 = vmatpush1.bf16.msra.mxu0 0
  %694 = vmatprep.subr.bf16.mxu0 0
  %695 = vmatpush1.bf16.msra.mxu0 0
  %696 = vmatprep.subr.bf16.mxu0 0
  %697 = vmatpush1.bf16.msra.mxu0 0
  %698 = vmatprep.subr.bf16.mxu0 0
  %699 = vmatpush1.bf16.msra.mxu0 0
  %700 = vmatprep.mubr.bf16.mxu0 0
  %701 = vmatmul.mubr.bf16.gmra.mrb[0].mxu0 %v666
  %v702 = vpop.f32.mrb[0].mxu0
  %v703 = vadd.f32 %v662, %v702
  %v704 = vpop.f32.mrb[0].mxu0
  %v705 = vpop.f32.mrb[0].mxu0
  %v706 = vadd.f32 %v662, %v705
  %v707 = vpop.f32.mrb[0].mxu0
  %708 = vdwg.mxu0
  %v709 = vmax.f32 %v703, 0.0
  %v710 = vmax.f32 %v706, 0.0
  %v711 = vld [vmem:[%s8] sm:$0xf]
  %v712 = vld [vmem:[%s8 + $0x4] sm:$0xf]
  %v713 = vld [vmem:[%s8 + $0x8] sm:$0xf]
  %v714 = vld [vmem:[%s8 + $0xc] sm:$0xf]
  %v715 = vld [vmem:[%s8 + $0x10] sm:$0xf]
  %v716 = vld [vmem:[%s8 + $0x14] sm:$0xf]
  %v717 = vld [vmem:[%s8 + $0x18] sm:$0xf]
  %v718 = vld [vmem:[%s8 + $0x1c] sm:$0xf]
  %v719 = vpack.c.bf16 %v710, %v709
  %v720 = vld [vmem:[%s9 + $0x3] sm:$0x1]
  %v722 = vlaneseq
  %v723 = vshrl.u32 %v722, 7
  %v724 = vsub.s32 0, %v723
  %v725 = vrot.slane %v720, %v724
  %v734 = vunpack.c.l.b16 %v711
  %v735 = vunpack.c.l.b16 %v712
  %v736 = vunpack.c.l.b16 %v713
  %v737 = vunpack.c.l.b16 %v714
  %v738 = vunpack.c.l.b16 %v715
  %v739 = vunpack.c.l.b16 %v716
  %v740 = vunpack.c.l.b16 %v717
  %v741 = vunpack.c.l.b16 %v718
  %v742 = vpack.c.b16 %v735, %v734
  %v743 = vpack.c.b16 %v737, %v736
  %v744 = vpack.c.b16 %v739, %v738
  %v745 = vpack.c.b16 %v741, %v740
  %750 = vrot.lane.b32.xlu0 %v725, 116
  %v751 = vpop.permute.xlu0 %750
  %vm753 = vcmask 523264
  %v755 = vsel %vm753, %v719, 0
  %757 = vmatprep.subr.bf16.mxu0 0
  %758 = vmatpush1.bf16.msra.mxu0 %v742
  %759 = vmatprep.subr.bf16.mxu0 0
  %760 = vmatpush1.bf16.msra.mxu0 %v743
  %761 = vmatprep.subr.bf16.mxu0 0
  %762 = vmatpush1.bf16.msra.mxu0 %v744
  %763 = vmatprep.subr.bf16.mxu0 0
  %764 = vmatpush1.bf16.msra.mxu0 %v745
  %765 = vmatprep.subr.bf16.mxu0 0
  %766 = vmatpush1.bf16.msra.mxu0 0
  %767 = vmatprep.subr.bf16.mxu0 0
  %768 = vmatpush1.bf16.msra.mxu0 0
  %769 = vmatprep.subr.bf16.mxu0 0
  %770 = vmatpush1.bf16.msra.mxu0 0
  %771 = vmatprep.subr.bf16.mxu0 0
  %772 = vmatpush1.bf16.msra.mxu0 0
  %773 = vmatprep.subr.bf16.mxu0 0
  %774 = vmatpush1.bf16.msra.mxu0 0
  %775 = vmatprep.subr.bf16.mxu0 0
  %776 = vmatpush1.bf16.msra.mxu0 0
  %777 = vmatprep.subr.bf16.mxu0 0
  %778 = vmatpush1.bf16.msra.mxu0 0
  %779 = vmatprep.subr.bf16.mxu0 0
  %780 = vmatpush1.bf16.msra.mxu0 0
  %781 = vmatprep.subr.bf16.mxu0 0
  %782 = vmatpush1.bf16.msra.mxu0 0
  %783 = vmatprep.subr.bf16.mxu0 0
  %784 = vmatpush1.bf16.msra.mxu0 0
  %785 = vmatprep.subr.bf16.mxu0 0
  %786 = vmatpush1.bf16.msra.mxu0 0
  %787 = vmatprep.subr.bf16.mxu0 0
  %788 = vmatpush1.bf16.msra.mxu0 0
  %789 = vmatprep.mubr.bf16.mxu0 0
  %790 = vmatmul.mubr.bf16.gmra.mrb[0].mxu0 %v755
  %v791 = vpop.f32.mrb[0].mxu0
  %v792 = vadd.f32 %v751, %v791
  %v793 = vpop.f32.mrb[0].mxu0
  %v794 = vpop.f32.mrb[0].mxu0
  %v795 = vadd.f32 %v751, %v794
  %v796 = vpop.f32.mrb[0].mxu0
  %797 = vdwg.mxu0
  %v798 = vmax.f32 %v792, 0.0
  %v799 = vmax.f32 %v795, 0.0
  %v800 = vld [vmem:[%s7 + $0x8] sm:$0xf]
  %v801 = vld [vmem:[%s7 + $0x14] sm:$0xf]
  %v802 = vld [vmem:[%s7 + $0x20] sm:$0xf]
  %v803 = vld [vmem:[%s7 + $0x2c] sm:$0xf]
  %v804 = vpack.c.bf16 %v799, %v798
  %v809 = vunpack.c.l.b16 %v800
  %v810 = vunpack.c.l.b16 %v801
  %v811 = vunpack.c.l.b16 %v802
  %v812 = vunpack.c.l.b16 %v803
  %v813 = vpack.c.b16 %v810, %v809
  %v814 = vpack.c.b16 %v812, %v811
  %815 = vrot.lane.b32.xlu0 %v813, 116
  %v816 = vpop.permute.xlu0 %815
  %817 = vrot.lane.b32.xlu0 %v814, 116
  %v818 = vpop.permute.xlu0 %817
  %821 = vrot.lane.b32.xlu0 %v725, 84
  %v822 = vpop.permute.xlu0 %821
  %v825 = vsel %vm664, %v804, 0
  %827 = vmatprep.subr.bf16.mxu0 0
  %828 = vmatpush1.bf16.msra.mxu0 %v816
  %829 = vmatprep.subr.bf16.mxu0 0
  %830 = vmatpush1.bf16.msra.mxu0 %v818
  %831 = vmatprep.subr.bf16.mxu0 0
  %832 = vmatpush1.bf16.msra.mxu0 0
  %833 = vmatprep.subr.bf16.mxu0 0
  %834 = vmatpush1.bf16.msra.mxu0 0
  %835 = vmatprep.subr.bf16.mxu0 0
  %836 = vmatpush1.bf16.msra.mxu0 0
  %837 = vmatprep.subr.bf16.mxu0 0
  %838 = vmatpush1.bf16.msra.mxu0 0
  %839 = vmatprep.subr.bf16.mxu0 0
  %840 = vmatpush1.bf16.msra.mxu0 0
  %841 = vmatprep.subr.bf16.mxu0 0
  %842 = vmatpush1.bf16.msra.mxu0 0
  %843 = vmatprep.subr.bf16.mxu0 0
  %844 = vmatpush1.bf16.msra.mxu0 0
  %845 = vmatprep.subr.bf16.mxu0 0
  %846 = vmatpush1.bf16.msra.mxu0 0
  %847 = vmatprep.subr.bf16.mxu0 0
  %848 = vmatpush1.bf16.msra.mxu0 0
  %849 = vmatprep.subr.bf16.mxu0 0
  %850 = vmatpush1.bf16.msra.mxu0 0
  %851 = vmatprep.subr.bf16.mxu0 0
  %852 = vmatpush1.bf16.msra.mxu0 0
  %853 = vmatprep.subr.bf16.mxu0 0
  %854 = vmatpush1.bf16.msra.mxu0 0
  %855 = vmatprep.subr.bf16.mxu0 0
  %856 = vmatpush1.bf16.msra.mxu0 0
  %857 = vmatprep.subr.bf16.mxu0 0
  %858 = vmatpush1.bf16.msra.mxu0 0
  %859 = vmatprep.mubr.bf16.mxu0 0
  %860 = vmatmul.mubr.bf16.gmra.mrb[0].mxu0 %v825
  %v861 = vpop.f32.mrb[0].mxu0
  %v862 = vadd.f32 %v822, %v861
  %v863 = vpop.f32.mrb[0].mxu0
  %v864 = vpop.f32.mrb[0].mxu0
  %v865 = vadd.f32 %v822, %v864
  %v866 = vpop.f32.mrb[0].mxu0
  %867 = vdwg.mxu0
  %v868 = vadd.f32 %v862, %v865
  %v869 = vmax.f32 %v868, %v862
  %v870 = vmax.f32 %v869, %v865
  %v871 = vsub.f32 %v868, %v870
  %v872 = vmul.f32 %v871, 1.442695
  %v873 = vpow.pop %v872
  %v874 = vmul.f32 %v873, 2.0
  %v875 = vsub.f32 %v862, %v870
  %v876 = vmul.f32 %v875, 1.442695
  %v877 = vpow.pop %v876
  %v878 = vadd.f32 %v874, %v877
  %v879 = vsub.f32 %v865, %v870
  %v880 = vmul.f32 %v879, 1.442695
  %v881 = vpow.pop %v880
  %v882 = vadd.f32 %v878, %v881
  %v883 = vlog2.pop %v882
  %v884 = vmul.f32 %v883, 0.6931472
  %v885 = vadd.f32 %v884, %v870
  %v886 = vmax.f32 %v862, 0.0
  %v887 = vmax.f32 %v886, %v865
  %v888 = vsub.f32 0.0, %v887
  %v889 = vmul.f32 %v888, 1.442695
  %v890 = vpow.pop %v889
  %v891 = vmul.f32 %v890, 2.0
  %v892 = vsub.f32 %v862, %v887
  %v893 = vmul.f32 %v892, 1.442695
  %v894 = vpow.pop %v893
  %v895 = vadd.f32 %v891, %v894
  %v896 = vsub.f32 %v865, %v887
  %v897 = vmul.f32 %v896, 1.442695
  %v898 = vpow.pop %v897
  %v899 = vadd.f32 %v895, %v898
  %v900 = vlog2.pop %v899
  %v901 = vmul.f32 %v900, 0.6931472
  %v902 = vadd.f32 %v901, %v887
  %v903 = vsub.f32 %v885, %v902
  %905 = vset.pattern.permute.xlu0 0
  %906 = vperm.xlu0 %905, %v36
  %v907 = vpop.permute.xlu0 %906
  %v909 = vmul.f32 %v907, %v903
  %v910 = vsub.f32 1.0, %v36
  %912 = vset.pattern.permute.xlu0 0
  %913 = vperm.xlu0 %912, %v910
  %v914 = vpop.permute.xlu0 %913
  %v916 = vmul.f32 %v914, %v862
  %v917 = vadd.f32 %v909, %v916
  %919 = vrot.lane.b32.xlu0 %v917, 32
  %v920 = vpop.permute.xlu0 %919
  %v922 = vld [vmem:[%s7] sm:$0xff]
  %v923 = vld [vmem:[%s7 + $0xc] sm:$0xff]
  %v924 = vld [vmem:[%s7 + $0x18] sm:$0xff]
  %v925 = vld [vmem:[%s7 + $0x24] sm:$0xff]
  %v926 = vpack.c.bf16 %v920, %v293
  %v927 = vpack.c.bf16 %v610, %v610
  %v928 = vld [vmem:[%s9 + $0x1] sm:$0x3]
  %v930 = vlaneseq
  %v931 = vshrl.u32 %v930, 7
  %v932 = vsub.s32 0, %v931
  %v933 = vrot.slane %v928, %v932
  %v934 = vlaneseq
  %v935 = vshrl.u32 %v934, 7
  %v936 = vsub.s32 1, %v935
  %v937 = vrot.slane %v928, %v936
  %942 = vrot.lane.b32.xlu0 %v926, 96
  %v943 = vpop.permute.xlu0 %942
  %944 = vrot.lane.b32.xlu0 %v927, 96
  %v945 = vpop.permute.xlu0 %944
  %v950 = vunpack.c.l.b16 %v922
  %v951 = vunpack.c.h.b16 %v922
  %v952 = vunpack.c.l.b16 %v923
  %v953 = vunpack.c.h.b16 %v923
  %v954 = vunpack.c.l.b16 %v924
  %v955 = vunpack.c.h.b16 %v924
  %v956 = vunpack.c.l.b16 %v925
  %v957 = vunpack.c.h.b16 %v925
  %v958 = vpack.c.b16 %v952, %v950
  %v959 = vpack.c.b16 %v953, %v951
  %v960 = vpack.c.b16 %v956, %v954
  %v961 = vpack.c.b16 %v957, %v955
  %v967 = vsel %vm664, %v943, 0
  %v970 = vsel %vm664, %v945, 0
  %972 = vmatprep.subr.bf16.mxu0 %v959
  %973 = vmatpush1.bf16.msra.mxu0 %v958
  %974 = vmatprep.subr.bf16.mxu0 %v961
  %975 = vmatpush1.bf16.msra.mxu0 %v960
  %976 = vmatprep.subr.bf16.mxu0 0
  %977 = vmatpush1.bf16.msra.mxu0 0
  %978 = vmatprep.subr.bf16.mxu0 0
  %979 = vmatpush1.bf16.msra.mxu0 0
  %980 = vmatprep.subr.bf16.mxu0 0
  %981 = vmatpush1.bf16.msra.mxu0 0
  %982 = vmatprep.subr.bf16.mxu0 0
  %983 = vmatpush1.bf16.msra.mxu0 0
  %984 = vmatprep.subr.bf16.mxu0 0
  %985 = vmatpush1.bf16.msra.mxu0 0
  %986 = vmatprep.subr.bf16.mxu0 0
  %987 = vmatpush1.bf16.msra.mxu0 0
  %988 = vmatprep.subr.bf16.mxu0 0
  %989 = vmatpush1.bf16.msra.mxu0 0
  %990 = vmatprep.subr.bf16.mxu0 0
  %991 = vmatpush1.bf16.msra.mxu0 0
  %992 = vmatprep.subr.bf16.mxu0 0
  %993 = vmatpush1.bf16.msra.mxu0 0
  %994 = vmatprep.subr.bf16.mxu0 0
  %995 = vmatpush1.bf16.msra.mxu0 0
  %996 = vmatprep.subr.bf16.mxu0 0
  %997 = vmatpush1.bf16.msra.mxu0 0
  %998 = vmatprep.subr.bf16.mxu0 0
  %999 = vmatpush1.bf16.msra.mxu0 0
  %1000 = vmatprep.subr.bf16.mxu0 0
  %1001 = vmatpush1.bf16.msra.mxu0 0
  %1002 = vmatprep.subr.bf16.mxu0 0
  %1003 = vmatpush1.bf16.msra.mxu0 0
  %1004 = vmatprep.mubr.bf16.mxu0 0
  %1005 = vmatmul.mubr.bf16.gmra.mrb[0].mxu0 %v967
  %v1006 = vpop.f32.mrb[0].mxu0
  %v1007 = vadd.f32 %v933, %v1006
  %v1008 = vpop.f32.mrb[0].mxu0
  %v1009 = vadd.f32 %v937, %v1008
  %v1010 = vpop.f32.mrb[0].mxu0
  %v1011 = vadd.f32 %v933, %v1010
  %v1012 = vpop.f32.mrb[0].mxu0
  %v1013 = vadd.f32 %v937, %v1012
  %1014 = vmatprep.mubr.bf16.mxu0 0
  %1015 = vmatmul.mubr.bf16.gmra.mrb[0].mxu0 %v970
  %v1016 = vpop.f32.mrb[0].mxu0
  %v1017 = vadd.f32 %v933, %v1016
  %v1018 = vpop.f32.mrb[0].mxu0
  %v1019 = vadd.f32 %v937, %v1018
  %v1020 = vpop.f32.mrb[0].mxu0
  %v1021 = vpop.f32.mrb[0].mxu0
  %1022 = vdwg.mxu0
  %v1023 = vsub.f32 0.0, %v1009
  %v1024 = vmul.f32 %v1023, 1.442695
  %v1025 = vpow.pop %v1024
  %v1026 = vadd.f32 %v1025, 1.0
  %v1027 = vrcp.pop %v1026
  %v1028 = vmul.f32 1.0, %v1027
  %v1029 = vsub.f32 0.0, %v1013
  %v1030 = vmul.f32 %v1029, 1.442695
  %v1031 = vpow.pop %v1030
  %v1032 = vadd.f32 %v1031, 1.0
  %v1033 = vrcp.pop %v1032
  %v1034 = vmul.f32 1.0, %v1033
  %v1035 = vsub.f32 0.0, %v1019
  %v1036 = vmul.f32 %v1035, 1.442695
  %v1037 = vpow.pop %v1036
  %v1038 = vadd.f32 %v1037, 1.0
  %v1039 = vrcp.pop %v1038
  %v1040 = vmul.f32 1.0, %v1039
  %v1041 = vadd.f32 %v1009, %v1013
  %v1042 = vadd.f32 %v1041, %v1019
  %v1043 = vmul.f32 %v1042, 0.33333334
  %v1044 = vmul.f32 %v907, %v1043
  %v1045 = vmul.f32 %v1041, 0.5
  %v1046 = vmul.f32 %v914, %v1045
  %v1047 = vadd.f32 %v1044, %v1046
  %v1048 = vlaneseq
  %v1049 = vshrl.u32 %v1048, 7
  %v1050 = vadd.s32 %v1049, 8
  %v1051 = vadd.s32 %v1049, 16
  %v1052 = vadd.s32 %v1049, 24
  %v1053 = vadd.s32 %v1049, 32
  %v1054 = vadd.s32 %v1049, 40
  %v1055 = vadd.s32 %v1049, 48
  %v1056 = vadd.s32 %v1049, 56
  %v1057 = vadd.s32 %v1049, 64
  %v1058 = vadd.s32 %v1049, 72
  %v1059 = vadd.s32 %v1049, 80
  %v1060 = vadd.s32 %v1049, 88
  %v1061 = vadd.s32 %v1049, 96
  %v1062 = vadd.s32 %v1049, 104
  %v1063 = vadd.s32 %v1049, 112
  %v1064 = vadd.s32 %v1049, 120
  %v1065 = vlaneseq
  %v1066 = vand.u32 %v1065, 127
  %v1067 = vmul.u32 %v1066, 32
  %vm1068 = vcmp.ge.s32.totalorder %v1049, %v1067
  %vm1069 = vcmp.ge.s32.totalorder %v1050, %v1067
  %vm1070 = vcmp.ge.s32.totalorder %v1051, %v1067
  %vm1071 = vcmp.ge.s32.totalorder %v1052, %v1067
  %vm1072 = vcmp.ge.s32.totalorder %v1053, %v1067
  %vm1073 = vcmp.ge.s32.totalorder %v1054, %v1067
  %vm1074 = vcmp.ge.s32.totalorder %v1055, %v1067
  %vm1075 = vcmp.ge.s32.totalorder %v1056, %v1067
  %vm1076 = vcmp.ge.s32.totalorder %v1057, %v1067
  %vm1077 = vcmp.ge.s32.totalorder %v1058, %v1067
  %vm1078 = vcmp.ge.s32.totalorder %v1059, %v1067
  %vm1079 = vcmp.ge.s32.totalorder %v1060, %v1067
  %vm1080 = vcmp.ge.s32.totalorder %v1061, %v1067
  %vm1081 = vcmp.ge.s32.totalorder %v1062, %v1067
  %vm1082 = vcmp.ge.s32.totalorder %v1063, %v1067
  %vm1083 = vcmp.ge.s32.totalorder %v1064, %v1067
  %v1084 = vadd.s32 %v1067, 32
  %vm1085 = vcmp.lt.s32.totalorder %v1049, %v1084
  %vm1086 = vcmp.lt.s32.totalorder %v1050, %v1084
  %vm1087 = vcmp.lt.s32.totalorder %v1051, %v1084
  %vm1088 = vcmp.lt.s32.totalorder %v1052, %v1084
  %vm1089 = vcmp.lt.s32.totalorder %v1053, %v1084
  %vm1090 = vcmp.lt.s32.totalorder %v1054, %v1084
  %vm1091 = vcmp.lt.s32.totalorder %v1055, %v1084
  %vm1092 = vcmp.lt.s32.totalorder %v1056, %v1084
  %vm1093 = vcmp.lt.s32.totalorder %v1057, %v1084
  %vm1094 = vcmp.lt.s32.totalorder %v1058, %v1084
  %vm1095 = vcmp.lt.s32.totalorder %v1059, %v1084
  %vm1096 = vcmp.lt.s32.totalorder %v1060, %v1084
  %vm1097 = vcmp.lt.s32.totalorder %v1061, %v1084
  %vm1098 = vcmp.lt.s32.totalorder %v1062, %v1084
  %vm1099 = vcmp.lt.s32.totalorder %v1063, %v1084
  %vm1100 = vcmp.lt.s32.totalorder %v1064, %v1084
  %vm1101 = vmand %vm1068, %vm1085
  %vm1102 = vmand %vm1069, %vm1086
  %vm1103 = vmand %vm1070, %vm1087
  %vm1104 = vmand %vm1071, %vm1088
  %vm1105 = vmand %vm1072, %vm1089
  %vm1106 = vmand %vm1073, %vm1090
  %vm1107 = vmand %vm1074, %vm1091
  %vm1108 = vmand %vm1075, %vm1092
  %vm1109 = vmand %vm1076, %vm1093
  %vm1110 = vmand %vm1077, %vm1094
  %vm1111 = vmand %vm1078, %vm1095
  %vm1112 = vmand %vm1079, %vm1096
  %vm1113 = vmand %vm1080, %vm1097
  %vm1114 = vmand %vm1081, %vm1098
  %vm1115 = vmand %vm1082, %vm1099
  %vm1116 = vmand %vm1083, %vm1100
  %v1117 = vsel %vm1101, 1, 0
  %v1118 = vsel %vm1102, 1, 0
  %v1119 = vsel %vm1103, 1, 0
  %v1120 = vsel %vm1104, 1, 0
  %v1121 = vsel %vm1105, 1, 0
  %v1122 = vsel %vm1106, 1, 0
  %v1123 = vsel %vm1107, 1, 0
  %v1124 = vsel %vm1108, 1, 0
  %v1125 = vsel %vm1109, 1, 0
  %v1126 = vsel %vm1110, 1, 0
  %v1127 = vsel %vm1111, 1, 0
  %v1128 = vsel %vm1112, 1, 0
  %v1129 = vsel %vm1113, 1, 0
  %v1130 = vsel %vm1114, 1, 0
  %v1131 = vsel %vm1115, 1, 0
  %v1132 = vsel %vm1116, 1, 0
  %v1133 = vcvt.s32.f32 %v1117
  %v1134 = vcvt.s32.f32 %v1118
  %v1135 = vcvt.s32.f32 %v1119
  %v1136 = vcvt.s32.f32 %v1120
  %v1137 = vcvt.s32.f32 %v1121
  %v1138 = vcvt.s32.f32 %v1122
  %v1139 = vcvt.s32.f32 %v1123
  %v1140 = vcvt.s32.f32 %v1124
  %v1141 = vcvt.s32.f32 %v1125
  %v1142 = vcvt.s32.f32 %v1126
  %v1143 = vcvt.s32.f32 %v1127
  %v1144 = vcvt.s32.f32 %v1128
  %v1145 = vcvt.s32.f32 %v1129
  %v1146 = vcvt.s32.f32 %v1130
  %v1147 = vcvt.s32.f32 %v1131
  %v1148 = vcvt.s32.f32 %v1132
  %1150 = vrot.lane.b32.xlu0 %v1047, 32
  %v1151 = vpop.permute.xlu0 %1150
  %1153 = vrot.lane.b32.xlu0 %v1047, 64
  %v1154 = vpop.permute.xlu0 %1153
  %1156 = vrot.lane.b32.xlu0 %v1047, 96
  %v1157 = vpop.permute.xlu0 %1156
  %v1159 = vsel %vm664, %v1047, %v1151
  %v1160 = vsel %vm753, %v1159, %v1154
  %vm1161 = vcmask 785408
  %v1162 = vsel %vm1161, %v1160, %v1157
  %v1163 = vmul.f32 %v1007, %v1162
  %v1164 = vmul.f32 %v1011, %v1162
  %v1165 = vmul.f32 %v1017, %v1162
  %1166 = vmatprep.subr.mxu0 0.0
  %1167 = vmatpush1.msra.mxu0 %v1133
  %1168 = vmatprep.subr.mxu0 0.0
  %1169 = vmatpush1.msra.mxu0 %v1134
  %1170 = vmatprep.subr.mxu0 0.0
  %1171 = vmatpush1.msra.mxu0 %v1135
  %1172 = vmatprep.subr.mxu0 0.0
  %1173 = vmatpush1.msra.mxu0 %v1136
  %1174 = vmatprep.subr.mxu0 0.0
  %1175 = vmatpush1.msra.mxu0 %v1137
  %1176 = vmatprep.subr.mxu0 0.0
  %1177 = vmatpush1.msra.mxu0 %v1138
  %1178 = vmatprep.subr.mxu0 0.0
  %1179 = vmatpush1.msra.mxu0 %v1139
  %1180 = vmatprep.subr.mxu0 0.0
  %1181 = vmatpush1.msra.mxu0 %v1140
  %1182 = vmatprep.subr.mxu0 0.0
  %1183 = vmatpush1.msra.mxu0 %v1141
  %1184 = vmatprep.subr.mxu0 0.0
  %1185 = vmatpush1.msra.mxu0 %v1142
  %1186 = vmatprep.subr.mxu0 0.0
  %1187 = vmatpush1.msra.mxu0 %v1143
  %1188 = vmatprep.subr.mxu0 0.0
  %1189 = vmatpush1.msra.mxu0 %v1144
  %1190 = vmatprep.subr.mxu0 0.0
  %1191 = vmatpush1.msra.mxu0 %v1145
  %1192 = vmatprep.subr.mxu0 0.0
  %1193 = vmatpush1.msra.mxu0 %v1146
  %1194 = vmatprep.subr.mxu0 0.0
  %1195 = vmatpush1.msra.mxu0 %v1147
  %1196 = vmatprep.subr.mxu0 0.0
  %1197 = vmatpush1.msra.mxu0 %v1148
  %1198 = vmatprep.subr.mxu0 0.0
  %1199 = vmatpush1.msra.mxu0 0.0
  %1200 = vmatprep.subr.mxu0 0.0
  %1201 = vmatpush1.msra.mxu0 0.0
  %1202 = vmatprep.subr.mxu0 0.0
  %1203 = vmatpush1.msra.mxu0 0.0
  %1204 = vmatprep.subr.mxu0 0.0
  %1205 = vmatpush1.msra.mxu0 0.0
  %1206 = vmatprep.subr.mxu0 0.0
  %1207 = vmatpush1.msra.mxu0 0.0
  %1208 = vmatprep.subr.mxu0 0.0
  %1209 = vmatpush1.msra.mxu0 0.0
  %1210 = vmatprep.subr.mxu0 0.0
  %1211 = vmatpush1.msra.mxu0 0.0
  %1212 = vmatprep.subr.mxu0 0.0
  %1213 = vmatpush1.msra.mxu0 0.0
  %1214 = vmatprep.subr.mxu0 0.0
  %1215 = vmatpush1.msra.mxu0 0.0
  %1216 = vmatprep.subr.mxu0 0.0
  %1217 = vmatpush1.msra.mxu0 0.0
  %1218 = vmatprep.subr.mxu0 0.0
  %1219 = vmatpush1.msra.mxu0 0.0
  %1220 = vmatprep.subr.mxu0 0.0
  %1221 = vmatpush1.msra.mxu0 0.0
  %1222 = vmatprep.subr.mxu0 0.0
  %1223 = vmatpush1.msra.mxu0 0.0
  %1224 = vmatprep.subr.mxu0 0.0
  %1225 = vmatpush1.msra.mxu0 0.0
  %1226 = vmatprep.subr.mxu0 0.0
  %1227 = vmatpush1.msra.mxu0 0.0
  %1228 = vmatprep.subr.mxu0 0.0
  %1229 = vmatpush1.msra.mxu0 0.0
  %1230 = vmatprep.mubr.f32.mxu0 0.0
  %1231 = vmatmul.mubr.f32.gmra.mrb[0].mxu0 %v1163
  %v1232 = vpop.f32.mrb[0].mxu0
  %v1233 = vadd.f32 0.0, %v1232
  %v1234 = vpop.f32.mrb[0].mxu0
  %1235 = vmatprep.mubr.f32.mxu0 0.0
  %1236 = vmatmul.mubr.f32.gmra.mrb[0].mxu0 %v1164
  %v1237 = vpop.f32.mrb[0].mxu0
  %v1238 = vadd.f32 0.0, %v1237
  %v1239 = vpop.f32.mrb[0].mxu0
  %1240 = vmatprep.mubr.f32.mxu0 0.0
  %1241 = vmatmul.mubr.f32.gmra.mrb[0].mxu0 %v1165
  %v1242 = vpop.f32.mrb[0].mxu0
  %v1243 = vadd.f32 0.0, %v1242
  %v1244 = vpop.f32.mrb[0].mxu0
  %1245 = vdwg.mxu0
  %v1246 = vmul.f32 %v1233, 0.17677669
  %v1247 = vmul.f32 %v1238, 0.17677669
  %v1248 = vmul.f32 %v1243, 0.17677669
  %vm1249 = vcmp.gt.f32.partialorder %v36, 0.5
  %v1250 = vsel %vm1249, 1, 0
  %1251 = vset.pattern.permute.xlu0 0
  %1252 = vperm.xlu0 %1251, %v1250
  %v1253 = vpop.permute.xlu0 %1252
  %vm1254 = vcmp.eq.s32.totalorder %v1253, 1
  %v1255 = vsel %vm1254, %v1248, -1e+30
  %v1256 = vmax.f32 %v1246, %v1247
  %v1257 = vmax.f32 %v1256, %v1255
  %v1258 = vsub.f32 %v1246, %v1257
  %v1259 = vmul.f32 %v1258, 1.442695
  %v1260 = vpow.pop %v1259
  %v1261 = vsub.f32 %v1247, %v1257
  %v1262 = vmul.f32 %v1261, 1.442695
  %v1263 = vpow.pop %v1262
  %v1264 = vsub.f32 %v1255, %v1257
  %v1265 = vmul.f32 %v1264, 1.442695
  %v1266 = vpow.pop %v1265
  %v1267 = vadd.f32 %v1260, %v1263
  %v1268 = vadd.f32 %v1267, %v1266
  %v1269 = vrcp.pop %v1268
  %v1270 = vmul.f32 %v1260, %v1269
  %v1271 = vmul.f32 %v1263, %v1269
  %v1272 = vmul.f32 %v1266, %v1269
  %1274 = vset.pattern.permute.xlu0 0
  %1275 = vperm.xlu0 %1274, %v1270
  %v1276 = vpop.permute.xlu0 %1275
  %v1278 = vmul.f32 %v1276, %v1009
  %1280 = vset.pattern.permute.xlu0 0
  %1281 = vperm.xlu0 %1280, %v1271
  %v1282 = vpop.permute.xlu0 %1281
  %v1284 = vmul.f32 %v1282, %v1013
  %v1285 = vadd.f32 %v1278, %v1284
  %1287 = vset.pattern.permute.xlu0 0
  %1288 = vperm.xlu0 %1287, %v1272
  %v1289 = vpop.permute.xlu0 %1288
  %v1291 = vmul.f32 %v1289, %v1019
  %v1292 = vadd.f32 %v1285, %v1291
  %1293 = vset.pattern.permute.xlu0 1
  %1294 = vperm.xlu0 %1293, %v1270
  %v1295 = vpop.permute.xlu0 %1294
  %v1297 = vmul.f32 %v1295, %v1009
  %1298 = vset.pattern.permute.xlu0 1
  %1299 = vperm.xlu0 %1298, %v1271
  %v1300 = vpop.permute.xlu0 %1299
  %v1302 = vmul.f32 %v1300, %v1013
  %v1303 = vadd.f32 %v1297, %v1302
  %1304 = vset.pattern.permute.xlu0 1
  %1305 = vperm.xlu0 %1304, %v1272
  %v1306 = vpop.permute.xlu0 %1305
  %v1308 = vmul.f32 %v1306, %v1019
  %v1309 = vadd.f32 %v1303, %v1308
  %1310 = vset.pattern.permute.xlu0 2
  %1311 = vperm.xlu0 %1310, %v1270
  %v1312 = vpop.permute.xlu0 %1311
  %v1314 = vmul.f32 %v1312, %v1009
  %1315 = vset.pattern.permute.xlu0 2
  %1316 = vperm.xlu0 %1315, %v1271
  %v1317 = vpop.permute.xlu0 %1316
  %v1319 = vmul.f32 %v1317, %v1013
  %v1320 = vadd.f32 %v1314, %v1319
  %1321 = vset.pattern.permute.xlu0 2
  %1322 = vperm.xlu0 %1321, %v1272
  %v1323 = vpop.permute.xlu0 %1322
  %v1325 = vmul.f32 %v1323, %v1019
  %v1326 = vadd.f32 %v1320, %v1325
  %1327 = vset.pattern.permute.xlu0 3
  %1328 = vperm.xlu0 %1327, %v1270
  %v1329 = vpop.permute.xlu0 %1328
  %v1331 = vmul.f32 %v1329, %v1009
  %1332 = vset.pattern.permute.xlu0 3
  %1333 = vperm.xlu0 %1332, %v1271
  %v1334 = vpop.permute.xlu0 %1333
  %v1336 = vmul.f32 %v1334, %v1013
  %v1337 = vadd.f32 %v1331, %v1336
  %1338 = vset.pattern.permute.xlu0 3
  %1339 = vperm.xlu0 %1338, %v1272
  %v1340 = vpop.permute.xlu0 %1339
  %v1342 = vmul.f32 %v1340, %v1019
  %v1343 = vadd.f32 %v1337, %v1342
  %1345 = vrot.lane.b32.xlu0 %v1292, 96
  %v1346 = vpop.permute.xlu0 %1345
  %1349 = vrot.lane.b32.xlu0 %v1326, 32
  %v1350 = vpop.permute.xlu0 %1349
  %1353 = vrot.lane.b32.xlu0 %v1343, 64
  %v1354 = vpop.permute.xlu0 %1353
  %v1356 = vsel %vm664, %v1346, %v1309
  %v1357 = vsel %vm753, %v1356, %v1350
  %v1358 = vsel %vm1161, %v1357, %v1354
  %v1359 = vld [vmem:[%s9 + $0x3] sm:$0x3]
  %v1361 = vlaneseq
  %v1362 = vshrl.u32 %v1361, 7
  %v1363 = vsub.s32 0, %v1362
  %v1364 = vrot.slane %v1359, %v1363
  %v1365 = vlaneseq
  %v1366 = vshrl.u32 %v1365, 7
  %v1367 = vsub.s32 1, %v1366
  %v1368 = vrot.slane %v1359, %v1367
  %1369 = vrot.lane.b32.xlu0 %v1364, 48
  %v1370 = vpop.permute.xlu0 %1369
  %1371 = vrot.lane.b32.xlu0 %v1368, 48
  %v1372 = vpop.permute.xlu0 %1371
  %v1373 = vsel %vm568, %v1370, %v1372
  %v1375 = vmul.f32 %v1358, %v1373
  %1376 = vrot.lane.b32.xlu0 %v725, 52
  %v1377 = vpop.permute.xlu0 %1376
  %1379 = vmatprep.subr.mxu0 0.0
  %1380 = vmatpush1.msra.mxu0 %v1133
  %1381 = vmatprep.subr.mxu0 0.0
  %1382 = vmatpush1.msra.mxu0 %v1134
  %1383 = vmatprep.subr.mxu0 0.0
  %1384 = vmatpush1.msra.mxu0 %v1135
  %1385 = vmatprep.subr.mxu0 0.0
  %1386 = vmatpush1.msra.mxu0 %v1136
  %1387 = vmatprep.subr.mxu0 0.0
  %1388 = vmatpush1.msra.mxu0 %v1137
  %1389 = vmatprep.subr.mxu0 0.0
  %1390 = vmatpush1.msra.mxu0 %v1138
  %1391 = vmatprep.subr.mxu0 0.0
  %1392 = vmatpush1.msra.mxu0 %v1139
  %1393 = vmatprep.subr.mxu0 0.0
  %1394 = vmatpush1.msra.mxu0 %v1140
  %1395 = vmatprep.subr.mxu0 0.0
  %1396 = vmatpush1.msra.mxu0 %v1141
  %1397 = vmatprep.subr.mxu0 0.0
  %1398 = vmatpush1.msra.mxu0 %v1142
  %1399 = vmatprep.subr.mxu0 0.0
  %1400 = vmatpush1.msra.mxu0 %v1143
  %1401 = vmatprep.subr.mxu0 0.0
  %1402 = vmatpush1.msra.mxu0 %v1144
  %1403 = vmatprep.subr.mxu0 0.0
  %1404 = vmatpush1.msra.mxu0 %v1145
  %1405 = vmatprep.subr.mxu0 0.0
  %1406 = vmatpush1.msra.mxu0 %v1146
  %1407 = vmatprep.subr.mxu0 0.0
  %1408 = vmatpush1.msra.mxu0 %v1147
  %1409 = vmatprep.subr.mxu0 0.0
  %1410 = vmatpush1.msra.mxu0 %v1148
  %1411 = vmatprep.subr.mxu0 0.0
  %1412 = vmatpush1.msra.mxu0 0.0
  %1413 = vmatprep.subr.mxu0 0.0
  %1414 = vmatpush1.msra.mxu0 0.0
  %1415 = vmatprep.subr.mxu0 0.0
  %1416 = vmatpush1.msra.mxu0 0.0
  %1417 = vmatprep.subr.mxu0 0.0
  %1418 = vmatpush1.msra.mxu0 0.0
  %1419 = vmatprep.subr.mxu0 0.0
  %1420 = vmatpush1.msra.mxu0 0.0
  %1421 = vmatprep.subr.mxu0 0.0
  %1422 = vmatpush1.msra.mxu0 0.0
  %1423 = vmatprep.subr.mxu0 0.0
  %1424 = vmatpush1.msra.mxu0 0.0
  %1425 = vmatprep.subr.mxu0 0.0
  %1426 = vmatpush1.msra.mxu0 0.0
  %1427 = vmatprep.subr.mxu0 0.0
  %1428 = vmatpush1.msra.mxu0 0.0
  %1429 = vmatprep.subr.mxu0 0.0
  %1430 = vmatpush1.msra.mxu0 0.0
  %1431 = vmatprep.subr.mxu0 0.0
  %1432 = vmatpush1.msra.mxu0 0.0
  %1433 = vmatprep.subr.mxu0 0.0
  %1434 = vmatpush1.msra.mxu0 0.0
  %1435 = vmatprep.subr.mxu0 0.0
  %1436 = vmatpush1.msra.mxu0 0.0
  %1437 = vmatprep.subr.mxu0 0.0
  %1438 = vmatpush1.msra.mxu0 0.0
  %1439 = vmatprep.subr.mxu0 0.0
  %1440 = vmatpush1.msra.mxu0 0.0
  %1441 = vmatprep.subr.mxu0 0.0
  %1442 = vmatpush1.msra.mxu0 0.0
  %1443 = vmatprep.mubr.f32.mxu0 0.0
  %1444 = vmatmul.mubr.f32.gmra.mrb[0].mxu0 %v1375
  %v1445 = vpop.f32.mrb[0].mxu0
  %v1446 = vadd.f32 %v1377, %v1445
  %v1447 = vpop.f32.mrb[0].mxu0
  %1448 = vdwg.mxu0
  %v1449 = vsub.f32 0.0, %v1446
  %v1450 = vmul.f32 %v1449, 1.442695
  %v1451 = vpow.pop %v1450
  %v1452 = vadd.f32 %v1451, 1.0
  %v1453 = vrcp.pop %v1452
  %v1454 = vmul.f32 1.0, %v1453
  %1456 = vrot.lane.b32.xlu0 %v865, 32
  %v1457 = vpop.permute.xlu0 %1456
  %1460 = vrot.lane.b32.xlu0 %v293, 32
  %v1461 = vpop.permute.xlu0 %1460
  %1464 = vrot.lane.b32.xlu0 %v610, 64
  %v1465 = vpop.permute.xlu0 %1464
  %1468 = vrot.lane.b32.xlu0 %v1034, 64
  %v1469 = vpop.permute.xlu0 %1468
  %1472 = vrot.lane.b32.xlu0 %v1028, 72
  %v1473 = vpop.permute.xlu0 %1472
  %1476 = vrot.lane.b32.xlu0 %v1040, 68
  %v1477 = vpop.permute.xlu0 %1476
  %1479 = vrot.lane.b32.xlu0 %v1270, 16
  %v1480 = vpop.permute.xlu0 %1479
  %1482 = vrot.lane.b32.xlu0 %v1271, 20
  %v1483 = vpop.permute.xlu0 %1482
  %1485 = vrot.lane.b32.xlu0 %v1272, 24
  %v1486 = vpop.permute.xlu0 %1485
  %v1488 = vsel %vm664, %v862, %v1457
  %v1489 = vsel %vm753, %v1488, %v1461
  %v1490 = vsel %vm1161, %v1489, %v1465
  %vm1491 = vcmask 31744
  %v1492 = vsel %vm1491, %v1454, %v1469
  %vm1493 = vcmask 64512
  %v1494 = vsel %vm1493, %v1492, %v1473
  %vm1495 = vcmask 97280
  %v1496 = vsel %vm1495, %v1494, %v1477
  %vm1497 = vcmask 130048
  %v1498 = vsel %vm1497, %v1496, %v1480
  %vm1499 = vcmask 162816
  %v1500 = vsel %vm1499, %v1498, %v1483
  %vm1501 = vcmask 195584
  %v1502 = vsel %vm1501, %v1500, %v1486
  %vm1503 = vcmask 228352
  %v1504 = vsel %vm1503, %v1502, 0.0
  %1505 = vst [vmem:[%s10] sm:$0xff] %v1490
  %1506 = vst [vmem:[%s10 + $0x8] sm:$0xff] %v1358
  %1507 = vst [vmem:[%s10 + $0x10] sm:$0xff] %v1504
  // Predicated region
  $region42: #{drfuse_forward.1} parent=0 // pred_check
    _
  $region43: #{drfuse_forward.1} parent=0 // pred_check_branch
    %1509 = sbr.rel (0) target = $region45
  $region44: #{drfuse_forward.1} parent=0 // pred_region
    _
  $region45: #{drfuse_forward.1} parent=0 // pred_fallthru
    _
  // Predicated region
  $region46: #{drfuse_forward.1} parent=0 // pred_check
    _
  $region47: #{drfuse_forward.1} parent=0 // pred_check_branch
    %1511 = sbr.rel (0) target = $region49
  $region48: #{drfuse_forward.1} parent=0 // pred_region
    _
  $region49: #{drfuse_forward.1} parent=0 // pred_fallthru
    _

</llo_original>
